<compile_context>
chip_gen: v5e
topology: v5e:2x2
jax: 0.10.0
libtpu: 0.0.40
codegen_flags: <defaults>
</compile_context>

<pallas_src>
import math

import jax
import jax.numpy as jnp
from jax.experimental import pallas as pl
from jax.experimental.pallas import tpu as pltpu

# ----------------------------- small BERT config -----------------------------
VOCAB = 100
TYPE_VOCAB = 2
MAX_POS = 64
HIDDEN = 32
HEADS = 2
HEAD_DIM = HIDDEN // HEADS
INTER = 64
LAYERS = 2
NUM_SEQ_LABELS = 3
NUM_TOK_LABELS = 5
LN_EPS = 1e-12

BATCH = 2
SEQ = 8

HEAD_PAD = 128  # packed classifier-head output width (lane-dense stores)

# bf16 matmul inputs are MXU-native on v5e/v6e/v7x; accumulation stays fp32
# via preferred_element_type.  All non-matmul math (LN, softmax, residuals)
# remains fp32, and the in-kernel embedding "gather" matmul stays fp32/exact.
MATMUL_DTYPE = jnp.bfloat16

# ----- packed 1-row parameter slab layout (rows of a (19, 128) f32 array) ----
VEC_EMB_LN_G = 0
VEC_EMB_LN_B = 1
VEC_HEAD_B = 2
VEC_LAYER_BASE = 3
VEC_PER_LAYER = 8        # qkv_b, o_b, attn_ln_g, attn_ln_b,
                         # ffn_i_b, ffn_o_b, ffn_ln_g, ffn_ln_b
NUM_VEC_ROWS = VEC_LAYER_BASE + LAYERS * VEC_PER_LAYER


# ------------------------------ in-kernel math --------------------------------
def _mm(a, b):
    return jnp.dot(a.astype(MATMUL_DTYPE), b.astype(MATMUL_DTYPE),
                   preferred_element_type=jnp.float32)


def _gelu(x):
    # TODO(synk): HF "gelu" is exact erf; tanh approximation differs by <1e-3.
    c = math.sqrt(2.0 / math.pi)
    return 0.5 * x * (1.0 + jnp.tanh(c * (x + 0.044715 * x * x * x)))


def _layernorm(x, g, b):
    # single-pass statistics: var = E[x^2] - mean^2 (halves XLU reduces)
    mean = jnp.mean(x, axis=-1, keepdims=True)
    mean_sq = jnp.mean(x * x, axis=-1, keepdims=True)
    var = mean_sq - mean * mean
    return (x - mean) * jax.lax.rsqrt(var + LN_EPS) * g + b


# --------------------------------- the kernel ---------------------------------
def fused_bert_kernel(
    ids_ref,          # (B*S, 2) int32: col0 = input_ids, col1 = token_type_ids
    mask_ref,         # (B, S) float32 0/1
    emb_tbl_ref,      # (VOCAB + MAX_POS + TYPE_VOCAB, HIDDEN) float32
    vecs_ref,         # (NUM_VEC_ROWS, 128) float32  -- all biases / LN params
    qkv_w_ref,        # (L, H, 3H) bf16
    o_w_ref,          # (L, H, H) bf16
    ffn_i_w_ref,      # (L, H, I) bf16
    ffn_o_w_ref,      # (L, I, H) bf16
    head_w_ref,       # (H, HEAD_PAD) bf16
    out_ref,          # (B*S, HEAD_PAD) float32
):
    scale = 1.0 / math.sqrt(HEAD_DIM)
    BS = BATCH * SEQ

    # ---- in-kernel embedding lookup (no XLA gather launches) ----------------
    word_ids = ids_ref[:, 0:1]                                     # (BS, 1) i32
    type_ids = ids_ref[:, 1:2]

    # word embedding: exact one-hot fp32 matmul on the MXU
    vocab_iota = jax.lax.broadcasted_iota(jnp.int32, (BS, VOCAB), 1)
    word_onehot = (vocab_iota == word_ids).astype(jnp.float32)
    word_emb = jnp.dot(word_onehot, emb_tbl_ref[0:VOCAB, :],
                       preferred_element_type=jnp.float32)         # (BS, H)

    # position embedding: position_ids = arange(S) for every batch row
    pos_rows = emb_tbl_ref[VOCAB:VOCAB + SEQ, :]                   # (S, H)
    pos_emb = jnp.concatenate([pos_rows] * BATCH, axis=0)          # (BS, H)

    # token-type embedding: TYPE_VOCAB == 2 -> 2-way select
    type_row0 = emb_tbl_ref[VOCAB + MAX_POS:VOCAB + MAX_POS + 1, :]
    type_row1 = emb_tbl_ref[VOCAB + MAX_POS + 1:VOCAB + MAX_POS + 2, :]
    type_emb = jnp.where(type_ids == 0, type_row0, type_row1)      # (BS, H)

    emb = word_emb + pos_emb + type_emb

    # additive attention mask, replicated per head: (B*HEADS, 1, S)
    add_mask = (1.0 - mask_ref[...]) * -1e9                        # (B, S)
    mask_bh = jnp.stack([add_mask[b:b + 1, :]
                         for b in range(BATCH) for _ in range(HEADS)], axis=0)

    # embedding LayerNorm; `hidden` stays a VMEM-resident value throughout
    hidden = _layernorm(emb,
                        vecs_ref[VEC_EMB_LN_G:VEC_EMB_LN_G + 1, :HIDDEN],
                        vecs_ref[VEC_EMB_LN_B:VEC_EMB_LN_B + 1, :HIDDEN])

    for l in range(LAYERS):                       # static unroll (LAYERS = 2)
        r = VEC_LAYER_BASE + l * VEC_PER_LAYER
        qkv_b = vecs_ref[r + 0:r + 1, :3 * HIDDEN]
        o_b = vecs_ref[r + 1:r + 2, :HIDDEN]
        a_ln_g = vecs_ref[r + 2:r + 3, :HIDDEN]
        a_ln_b = vecs_ref[r + 3:r + 4, :HIDDEN]
        f_i_b = vecs_ref[r + 4:r + 5, :INTER]
        f_o_b = vecs_ref[r + 5:r + 6, :HIDDEN]
        f_ln_g = vecs_ref[r + 6:r + 7, :HIDDEN]
        f_ln_b = vecs_ref[r + 7:r + 8, :HIDDEN]

        # ---- fused Q|K|V projection: one (B*S, 3H) matmul ----
        qkv = _mm(hidden, qkv_w_ref[l]) + qkv_b                    # (BS, 3H) f32

        # ---- stack per-(batch, head) tiles, run attention batched ----
        q_parts, k_parts, v_parts = [], [], []
        for b in range(BATCH):
            r0 = b * SEQ
            for h in range(HEADS):
                c0 = h * HEAD_DIM
                q_parts.append(qkv[r0:r0 + SEQ, c0:c0 + HEAD_DIM])
                k_parts.append(qkv[r0:r0 + SEQ,
                                   HIDDEN + c0:HIDDEN + c0 + HEAD_DIM])
                v_parts.append(qkv[r0:r0 + SEQ,
                                   2 * HIDDEN + c0:2 * HIDDEN + c0 + HEAD_DIM])
        q_all = jnp.stack(q_parts).astype(MATMUL_DTYPE)            # (B*NH, S, D)
        k_all = jnp.stack(k_parts).astype(MATMUL_DTYPE)
        v_all = jnp.stack(v_parts).astype(MATMUL_DTYPE)

        # batched scores (contracts on last dims -> no explicit k.T transpose)
        s = jnp.einsum("nqd,nkd->nqk", q_all, k_all,
                       preferred_element_type=jnp.float32) * scale + mask_bh
        # ONE softmax pass over all (batch, head) tiles
        s = s - jnp.max(s, axis=-1, keepdims=True)
        p = jnp.exp(s)
        p = p * pl.reciprocal(jnp.sum(p, axis=-1, keepdims=True), approx=True)
        ctx = jnp.einsum("nqk,nkd->nqd", p.astype(MATMUL_DTYPE), v_all,
                         preferred_element_type=jnp.float32)       # (B*NH, S, D)

        # merge heads back into a (B*S, HIDDEN) value (no scratch stores)
        ctx_flat = jnp.concatenate(
            [jnp.concatenate([ctx[b * HEADS + h] for h in range(HEADS)], axis=-1)
             for b in range(BATCH)], axis=0)                       # (BS, H)

        # ---- attention output projection + residual + LN ----
        attn_out = _mm(ctx_flat, o_w_ref[l]) + o_b
        hidden = _layernorm(attn_out + hidden, a_ln_g, a_ln_b)

        # ---- feed-forward + residual + LN ----
        inter = _gelu(_mm(hidden, ffn_i_w_ref[l]) + f_i_b)
        ffn_out = _mm(inter, ffn_o_w_ref[l]) + f_o_b
        hidden = _layernorm(ffn_out + hidden, f_ln_g, f_ln_b)

    # ---- fused classifier heads: single lane-dense (B*S, 128) store ----
    head_b = vecs_ref[VEC_HEAD_B:VEC_HEAD_B + 1, :]                # (1, 128)
    out_ref[...] = (_mm(hidden, head_w_ref[...]) + head_b).astype(out_ref.dtype)


# ------------------------------ wrapper helpers -------------------------------
def _fullspec(shape):
    zeros = (0,) * len(shape)
    return pl.BlockSpec(shape, lambda i, _z=zeros: _z)


# -------------------------- parameter initialization --------------------------
def init_params(key):
    std = 0.02
    keys = iter(jax.random.split(key, 64))

    def w(shape):
        return (std * jax.random.normal(next(keys), shape)).astype(jnp.float32)

    p = {
        "word_emb": w((VOCAB, HIDDEN)),
        "pos_emb": w((MAX_POS, HIDDEN)),
        "type_emb": w((TYPE_VOCAB, HIDDEN)),
        "emb_ln_g": jnp.ones((HIDDEN,), jnp.float32),
        "emb_ln_b": jnp.zeros((HIDDEN,), jnp.float32),
        "layers": [],
        "cls_w": w((HIDDEN, NUM_SEQ_LABELS)),
        "cls_b": jnp.zeros((NUM_SEQ_LABELS,), jnp.float32),
        "tok_w": w((HIDDEN, NUM_TOK_LABELS)),
        "tok_b": jnp.zeros((NUM_TOK_LABELS,), jnp.float32),
    }
    for _ in range(LAYERS):
        p["layers"].append({
            "q_w": w((HIDDEN, HIDDEN)), "q_b": jnp.zeros((HIDDEN,), jnp.float32),
            "k_w": w((HIDDEN, HIDDEN)), "k_b": jnp.zeros((HIDDEN,), jnp.float32),
            "v_w": w((HIDDEN, HIDDEN)), "v_b": jnp.zeros((HIDDEN,), jnp.float32),
            "o_w": w((HIDDEN, HIDDEN)), "o_b": jnp.zeros((HIDDEN,), jnp.float32),
            "attn_ln_g": jnp.ones((HIDDEN,), jnp.float32),
            "attn_ln_b": jnp.zeros((HIDDEN,), jnp.float32),
            "ffn_i_w": w((HIDDEN, INTER)), "ffn_i_b": jnp.zeros((INTER,), jnp.float32),
            "ffn_o_w": w((INTER, HIDDEN)), "ffn_o_b": jnp.zeros((HIDDEN,), jnp.float32),
            "ffn_ln_g": jnp.ones((HIDDEN,), jnp.float32),
            "ffn_ln_b": jnp.zeros((HIDDEN,), jnp.float32),
        })
    return p


# -------- one-time packing/casting (runs at init, NOT in the forward) ---------
def pack_params(params):
    # embedding tables slab (fp32: in-kernel lookup is exact)
    emb_tables = jnp.concatenate(
        [params["word_emb"], params["pos_emb"], params["type_emb"]], axis=0)

    # all 1-row vectors -> one (NUM_VEC_ROWS, 128) VMEM slab
    vecs = jnp.zeros((NUM_VEC_ROWS, 128), jnp.float32)
    vecs = vecs.at[VEC_EMB_LN_G, :HIDDEN].set(params["emb_ln_g"])
    vecs = vecs.at[VEC_EMB_LN_B, :HIDDEN].set(params["emb_ln_b"])
    vecs = vecs.at[VEC_HEAD_B, :NUM_SEQ_LABELS].set(params["cls_b"])
    vecs = vecs.at[VEC_HEAD_B,
                   NUM_SEQ_LABELS:NUM_SEQ_LABELS + NUM_TOK_LABELS].set(params["tok_b"])
    for l, lp in enumerate(params["layers"]):
        r = VEC_LAYER_BASE + l * VEC_PER_LAYER
        vecs = vecs.at[r + 0, :3 * HIDDEN].set(
            jnp.concatenate([lp["q_b"], lp["k_b"], lp["v_b"]]))
        vecs = vecs.at[r + 1, :HIDDEN].set(lp["o_b"])
        vecs = vecs.at[r + 2, :HIDDEN].set(lp["attn_ln_g"])
        vecs = vecs.at[r + 3, :HIDDEN].set(lp["attn_ln_b"])
        vecs = vecs.at[r + 4, :INTER].set(lp["ffn_i_b"])
        vecs = vecs.at[r + 5, :HIDDEN].set(lp["ffn_o_b"])
        vecs = vecs.at[r + 6, :HIDDEN].set(lp["ffn_ln_g"])
        vecs = vecs.at[r + 7, :HIDDEN].set(lp["ffn_ln_b"])

    # matmul weights: stacked per layer, cast to bf16 once here
    qkv_w = jnp.stack([jnp.concatenate([lp["q_w"], lp["k_w"], lp["v_w"]], axis=1)
                       for lp in params["layers"]]).astype(MATMUL_DTYPE)
    o_w = jnp.stack([lp["o_w"] for lp in params["layers"]]).astype(MATMUL_DTYPE)
    ffn_i_w = jnp.stack([lp["ffn_i_w"] for lp in params["layers"]]).astype(MATMUL_DTYPE)
    ffn_o_w = jnp.stack([lp["ffn_o_w"] for lp in params["layers"]]).astype(MATMUL_DTYPE)

    head_w = jnp.zeros((HIDDEN, HEAD_PAD), jnp.float32)
    head_w = head_w.at[:, :NUM_SEQ_LABELS].set(params["cls_w"])
    head_w = head_w.at[:, NUM_SEQ_LABELS:NUM_SEQ_LABELS + NUM_TOK_LABELS].set(
        params["tok_w"])
    head_w = head_w.astype(MATMUL_DTYPE)

    return {"emb_tables": emb_tables, "vecs": vecs, "qkv_w": qkv_w, "o_w": o_w,
            "ffn_i_w": ffn_i_w, "ffn_o_w": ffn_o_w, "head_w": head_w}


# --------------------------------- forward -----------------------------------
def bert_seq_tok_forward(packed, input_ids, attention_mask, token_type_ids=None):
    B, S = input_ids.shape
    if token_type_ids is None:
        token_type_ids = jnp.zeros_like(input_ids)

    ids = jnp.stack([input_ids.reshape(-1).astype(jnp.int32),
                     token_type_ids.reshape(-1).astype(jnp.int32)], axis=1)  # (B*S, 2)
    mask = attention_mask.astype(jnp.float32)                                # (B, S)

    inputs = (ids, mask, packed["emb_tables"], packed["vecs"],
              packed["qkv_w"], packed["o_w"], packed["ffn_i_w"],
              packed["ffn_o_w"], packed["head_w"])

    # advisory cost estimate so XLA schedules the surrounding glue sensibly
    flops = (2 * B * S * VOCAB * HIDDEN
             + LAYERS * (2 * B * S * HIDDEN * (3 * HIDDEN + HIDDEN + INTER)
                         + 2 * B * S * INTER * HIDDEN
                         + 4 * B * HEADS * S * S * HEAD_DIM)
             + 2 * B * S * HIDDEN * HEAD_PAD)
    transcendentals = LAYERS * (B * HEADS * S * S + B * S * INTER) + 8 * B * S
    bytes_accessed = (sum(int(x.size) * x.dtype.itemsize for x in inputs)
                      + B * S * HEAD_PAD * 4)

    out = pl.pallas_call(
        fused_bert_kernel,
        out_shape=jax.ShapeDtypeStruct((B * S, HEAD_PAD), jnp.float32),
        grid=(1,),  # single TC (v5e/v6e); toy size -> no benefit splitting on v7x
        in_specs=[_fullspec(x.shape) for x in inputs],
        out_specs=_fullspec((B * S, HEAD_PAD)),
        compiler_params=pltpu.CompilerParams(
            dimension_semantics=("arbitrary",)),
        cost_estimate=pl.CostEstimate(flops=flops,
                                      transcendentals=transcendentals,
                                      bytes_accessed=bytes_accessed),
    )(*inputs)

    # ---- slice the lane-dense head slab (dropout = identity at inference) ----
    out = out.reshape(B, S, HEAD_PAD)
    cls_logits = out[:, 0, :NUM_SEQ_LABELS]                                # (B, 3)
    token_logits = out[:, 1:, NUM_SEQ_LABELS:NUM_SEQ_LABELS + NUM_TOK_LABELS]
    return cls_logits, token_logits


# ----------------------------------- main ------------------------------------
if __name__ == "__main__":
    key = jax.random.PRNGKey(0)
    k_param, k_ids = jax.random.split(key)

    params = init_params(k_param)
    packed = pack_params(params)          # one-time packing, outside the forward
    input_ids = jax.random.randint(k_ids, (BATCH, SEQ), 0, VOCAB, dtype=jnp.int32)
    attention_mask = jnp.ones((BATCH, SEQ), jnp.int32)

    cls_logits, token_logits = jax.jit(bert_seq_tok_forward)(
        packed, input_ids, attention_mask
    )
    jax.block_until_ready((cls_logits, token_logits))

    assert cls_logits.shape == (BATCH, NUM_SEQ_LABELS)
    assert token_logits.shape == (BATCH, SEQ - 1, NUM_TOK_LABELS)
    print("KERNEL_OK")
</pallas_src>

<mosaic_0001>
module attributes {stable_mosaic.version = 11 : i64} {
  func.func @fused_bert_kernel(%arg0: i32, %arg1: memref<16x2xi32, #tpu.memory_space<vmem>>, %arg2: memref<2x8xf32, #tpu.memory_space<vmem>>, %arg3: memref<166x32xf32, #tpu.memory_space<vmem>>, %arg4: memref<19x128xf32, #tpu.memory_space<vmem>>, %arg5: memref<2x32x96xbf16, #tpu.memory_space<vmem>>, %arg6: memref<2x32x32xbf16, #tpu.memory_space<vmem>>, %arg7: memref<2x32x64xbf16, #tpu.memory_space<vmem>>, %arg8: memref<2x64x32xbf16, #tpu.memory_space<vmem>>, %arg9: memref<32x128xbf16, #tpu.memory_space<vmem>>, %arg10: memref<16x128xf32, #tpu.memory_space<vmem>>) attributes {dimension_semantics = [#tpu.dimension_semantics<arbitrary>], iteration_bounds = array<i64: 1>, scalar_prefetch = 0 : i64, scratch_operands = 0 : i64, tpu.core_type = #tpu.core_type<tc>, window_params = [{pipeline_mode = #tpu.pipeline_mode<synchronous>, transform_indices = @transform_0, window_bounds = array<i64: 16, 2>}, {pipeline_mode = #tpu.pipeline_mode<synchronous>, transform_indices = @transform_1, window_bounds = array<i64: 2, 8>}, {pipeline_mode = #tpu.pipeline_mode<synchronous>, transform_indices = @transform_2, window_bounds = array<i64: 166, 32>}, {pipeline_mode = #tpu.pipeline_mode<synchronous>, transform_indices = @transform_3, window_bounds = array<i64: 19, 128>}, {pipeline_mode = #tpu.pipeline_mode<synchronous>, transform_indices = @transform_4, window_bounds = array<i64: 2, 32, 96>}, {pipeline_mode = #tpu.pipeline_mode<synchronous>, transform_indices = @transform_5, window_bounds = array<i64: 2, 32, 32>}, {pipeline_mode = #tpu.pipeline_mode<synchronous>, transform_indices = @transform_6, window_bounds = array<i64: 2, 32, 64>}, {pipeline_mode = #tpu.pipeline_mode<synchronous>, transform_indices = @transform_7, window_bounds = array<i64: 2, 64, 32>}, {pipeline_mode = #tpu.pipeline_mode<synchronous>, transform_indices = @transform_8, window_bounds = array<i64: 32, 128>}, {pipeline_mode = #tpu.pipeline_mode<synchronous>, transform_indices = @transform_9, window_bounds = array<i64: 16, 128>}]} {
    %c0 = arith.constant 0 : index
    %c0_0 = arith.constant 0 : index
    %0 = vector.load %arg1[%c0, %c0_0] : memref<16x2xi32, #tpu.memory_space<vmem>>, vector<16x1xi32>
    %c0_1 = arith.constant 0 : index
    %c1 = arith.constant 1 : index
    %1 = vector.load %arg1[%c0_1, %c1] : memref<16x2xi32, #tpu.memory_space<vmem>>, vector<16x1xi32>
    %2 = tpu.iota {dimensions = array<i32: 1>} : vector<16x100xi32>
    %3 = vector.broadcast %0 : vector<16x1xi32> to vector<16x100xi32>
    %4 = arith.cmpi eq, %2, %3 : vector<16x100xi32>
    %5 = arith.extui %4 : vector<16x100xi1> to vector<16x100xi32>
    %6 = arith.sitofp %5 : vector<16x100xi32> to vector<16x100xf32>
    %c0_2 = arith.constant 0 : index
    %c0_3 = arith.constant 0 : index
    %7 = vector.load %arg3[%c0_2, %c0_3] : memref<166x32xf32, #tpu.memory_space<vmem>>, vector<100x32xf32>
    %cst = arith.constant dense<0.000000e+00> : vector<16x32xf32>
    %8 = tpu.matmul %6, %7, %cst {dimension_numbers = #tpu.dot_dimension_numbers<[1], [0], [0], [1], [0, 0, 1, 1], [], []>} : vector<16x100xf32>, vector<100x32xf32>, vector<16x32xf32> -> vector<16x32xf32>
    %c100 = arith.constant 100 : index
    %c0_4 = arith.constant 0 : index
    %9 = vector.load %arg3[%c100, %c0_4] : memref<166x32xf32, #tpu.memory_space<vmem>>, vector<8x32xf32>
    %10 = tpu.concatenate %9, %9 in 0 : vector<8x32xf32>, vector<8x32xf32> -> vector<16x32xf32>
    %c164 = arith.constant 164 : index
    %c0_5 = arith.constant 0 : index
    %11 = vector.load %arg3[%c164, %c0_5] : memref<166x32xf32, #tpu.memory_space<vmem>>, vector<1x32xf32>
    %c165 = arith.constant 165 : index
    %c0_6 = arith.constant 0 : index
    %12 = vector.load %arg3[%c165, %c0_6] : memref<166x32xf32, #tpu.memory_space<vmem>>, vector<1x32xf32>
    %c0_i32 = arith.constant 0 : i32
    %13 = vector.broadcast %c0_i32 : i32 to vector<16x1xi32>
    %14 = arith.cmpi eq, %1, %13 : vector<16x1xi32>
    %15 = vector.shape_cast %14 : vector<16x1xi1> to vector<16x1xi1>
    %16 = vector.broadcast %15 : vector<16x1xi1> to vector<16x32xi1>
    %17 = vector.shape_cast %11 : vector<1x32xf32> to vector<1x32xf32>
    %18 = vector.broadcast %17 : vector<1x32xf32> to vector<16x32xf32>
    %19 = vector.shape_cast %12 : vector<1x32xf32> to vector<1x32xf32>
    %20 = vector.broadcast %19 : vector<1x32xf32> to vector<16x32xf32>
    %21 = arith.select %16, %18, %20 : vector<16x32xi1>, vector<16x32xf32>
    %22 = arith.addf %8, %10 : vector<16x32xf32>
    %23 = arith.addf %22, %21 : vector<16x32xf32>
    %c0_7 = arith.constant 0 : index
    %c0_8 = arith.constant 0 : index
    %24 = vector.load %arg2[%c0_7, %c0_8] : memref<2x8xf32, #tpu.memory_space<vmem>>, vector<2x8xf32>
    %cst_9 = arith.constant 1.000000e+00 : f32
    %25 = vector.broadcast %cst_9 : f32 to vector<2x8xf32>
    %26 = arith.subf %25, %24 : vector<2x8xf32>
    %cst_10 = arith.constant -1.000000e+09 : f32
    %27 = vector.broadcast %cst_10 : f32 to vector<2x8xf32>
    %28 = arith.mulf %26, %27 : vector<2x8xf32>
    %29 = vector.extract_strided_slice %28 {offsets = [0, 0], sizes = [1, 8], strides = [1, 1]} : vector<2x8xf32> to vector<1x8xf32>
    %30 = vector.extract_strided_slice %28 {offsets = [0, 0], sizes = [1, 8], strides = [1, 1]} : vector<2x8xf32> to vector<1x8xf32>
    %31 = vector.extract_strided_slice %28 {offsets = [1, 0], sizes = [1, 8], strides = [1, 1]} : vector<2x8xf32> to vector<1x8xf32>
    %32 = vector.extract_strided_slice %28 {offsets = [1, 0], sizes = [1, 8], strides = [1, 1]} : vector<2x8xf32> to vector<1x8xf32>
    %33 = vector.shape_cast %29 : vector<1x8xf32> to vector<1x1x8xf32>
    %34 = vector.shape_cast %30 : vector<1x8xf32> to vector<1x1x8xf32>
    %35 = vector.shape_cast %31 : vector<1x8xf32> to vector<1x1x8xf32>
    %36 = vector.shape_cast %32 : vector<1x8xf32> to vector<1x1x8xf32>
    %37 = tpu.concatenate %33, %34, %35, %36 in 0 : vector<1x1x8xf32>, vector<1x1x8xf32>, vector<1x1x8xf32>, vector<1x1x8xf32> -> vector<4x1x8xf32>
    %c0_11 = arith.constant 0 : index
    %c0_12 = arith.constant 0 : index
    %38 = vector.load %arg4[%c0_11, %c0_12] : memref<19x128xf32, #tpu.memory_space<vmem>>, vector<1x32xf32>
    %c1_13 = arith.constant 1 : index
    %c0_14 = arith.constant 0 : index
    %39 = vector.load %arg4[%c1_13, %c0_14] : memref<19x128xf32, #tpu.memory_space<vmem>>, vector<1x32xf32>
    %cst_15 = arith.constant dense<0.000000e+00> : vector<16xf32>
    %40 = vector.multi_reduction <add>, %23, %cst_15 [1] : vector<16x32xf32> to vector<16xf32>
    %41 = vector.shape_cast %40 : vector<16xf32> to vector<16x1xf32>
    %cst_16 = arith.constant 3.200000e+01 : f32
    %42 = vector.broadcast %cst_16 : f32 to vector<16x1xf32>
    %43 = arith.divf %41, %42 : vector<16x1xf32>
    %44 = arith.mulf %23, %23 : vector<16x32xf32>
    %cst_17 = arith.constant dense<0.000000e+00> : vector<16xf32>
    %45 = vector.multi_reduction <add>, %44, %cst_17 [1] : vector<16x32xf32> to vector<16xf32>
    %46 = vector.shape_cast %45 : vector<16xf32> to vector<16x1xf32>
    %cst_18 = arith.constant 3.200000e+01 : f32
    %47 = vector.broadcast %cst_18 : f32 to vector<16x1xf32>
    %48 = arith.divf %46, %47 : vector<16x1xf32>
    %49 = arith.mulf %43, %43 : vector<16x1xf32>
    %50 = arith.subf %48, %49 : vector<16x1xf32>
    %51 = vector.broadcast %43 : vector<16x1xf32> to vector<16x32xf32>
    %52 = arith.subf %23, %51 : vector<16x32xf32>
    %cst_19 = arith.constant 9.99999996E-13 : f32
    %53 = vector.broadcast %cst_19 : f32 to vector<16x1xf32>
    %54 = arith.addf %50, %53 : vector<16x1xf32>
    %55 = math.rsqrt %54 : vector<16x1xf32>
    %56 = vector.broadcast %55 : vector<16x1xf32> to vector<16x32xf32>
    %57 = arith.mulf %52, %56 : vector<16x32xf32>
    %58 = vector.broadcast %38 : vector<1x32xf32> to vector<16x32xf32>
    %59 = arith.mulf %57, %58 : vector<16x32xf32>
    %60 = vector.broadcast %39 : vector<1x32xf32> to vector<16x32xf32>
    %61 = arith.addf %59, %60 : vector<16x32xf32>
    %c3 = arith.constant 3 : index
    %c0_20 = arith.constant 0 : index
    %62 = vector.load %arg4[%c3, %c0_20] : memref<19x128xf32, #tpu.memory_space<vmem>>, vector<1x96xf32>
    %c4 = arith.constant 4 : index
    %c0_21 = arith.constant 0 : index
    %63 = vector.load %arg4[%c4, %c0_21] : memref<19x128xf32, #tpu.memory_space<vmem>>, vector<1x32xf32>
    %c5 = arith.constant 5 : index
    %c0_22 = arith.constant 0 : index
    %64 = vector.load %arg4[%c5, %c0_22] : memref<19x128xf32, #tpu.memory_space<vmem>>, vector<1x32xf32>
    %c6 = arith.constant 6 : index
    %c0_23 = arith.constant 0 : index
    %65 = vector.load %arg4[%c6, %c0_23] : memref<19x128xf32, #tpu.memory_space<vmem>>, vector<1x32xf32>
    %c7 = arith.constant 7 : index
    %c0_24 = arith.constant 0 : index
    %66 = vector.load %arg4[%c7, %c0_24] : memref<19x128xf32, #tpu.memory_space<vmem>>, vector<1x64xf32>
    %c8 = arith.constant 8 : index
    %c0_25 = arith.constant 0 : index
    %67 = vector.load %arg4[%c8, %c0_25] : memref<19x128xf32, #tpu.memory_space<vmem>>, vector<1x32xf32>
    %c9 = arith.constant 9 : index
    %c0_26 = arith.constant 0 : index
    %68 = vector.load %arg4[%c9, %c0_26] : memref<19x128xf32, #tpu.memory_space<vmem>>, vector<1x32xf32>
    %c10 = arith.constant 10 : index
    %c0_27 = arith.constant 0 : index
    %69 = vector.load %arg4[%c10, %c0_27] : memref<19x128xf32, #tpu.memory_space<vmem>>, vector<1x32xf32>
    %c0_28 = arith.constant 0 : index
    %c0_29 = arith.constant 0 : index
    %c0_30 = arith.constant 0 : index
    %70 = vector.load %arg5[%c0_28, %c0_29, %c0_30] : memref<2x32x96xbf16, #tpu.memory_space<vmem>>, vector<1x32x96xbf16>
    %71 = vector.shape_cast %70 : vector<1x32x96xbf16> to vector<32x96xbf16>
    %72 = arith.truncf %61 : vector<16x32xf32> to vector<16x32xbf16>
    %cst_31 = arith.constant dense<0.000000e+00> : vector<16x96xf32>
    %73 = tpu.matmul %72, %71, %cst_31 {dimension_numbers = #tpu.dot_dimension_numbers<[1], [0], [0], [1], [0, 0, 1, 1], [], []>} : vector<16x32xbf16>, vector<32x96xbf16>, vector<16x96xf32> -> vector<16x96xf32>
    %74 = vector.broadcast %62 : vector<1x96xf32> to vector<16x96xf32>
    %75 = arith.addf %73, %74 : vector<16x96xf32>
    %76 = vector.extract_strided_slice %75 {offsets = [0, 0], sizes = [8, 16], strides = [1, 1]} : vector<16x96xf32> to vector<8x16xf32>
    %77 = vector.extract_strided_slice %75 {offsets = [0, 32], sizes = [8, 16], strides = [1, 1]} : vector<16x96xf32> to vector<8x16xf32>
    %78 = vector.extract_strided_slice %75 {offsets = [0, 64], sizes = [8, 16], strides = [1, 1]} : vector<16x96xf32> to vector<8x16xf32>
    %79 = vector.extract_strided_slice %75 {offsets = [0, 16], sizes = [8, 16], strides = [1, 1]} : vector<16x96xf32> to vector<8x16xf32>
    %80 = vector.extract_strided_slice %75 {offsets = [0, 48], sizes = [8, 16], strides = [1, 1]} : vector<16x96xf32> to vector<8x16xf32>
    %81 = vector.extract_strided_slice %75 {offsets = [0, 80], sizes = [8, 16], strides = [1, 1]} : vector<16x96xf32> to vector<8x16xf32>
    %82 = vector.extract_strided_slice %75 {offsets = [8, 0], sizes = [8, 16], strides = [1, 1]} : vector<16x96xf32> to vector<8x16xf32>
    %83 = vector.extract_strided_slice %75 {offsets = [8, 32], sizes = [8, 16], strides = [1, 1]} : vector<16x96xf32> to vector<8x16xf32>
    %84 = vector.extract_strided_slice %75 {offsets = [8, 64], sizes = [8, 16], strides = [1, 1]} : vector<16x96xf32> to vector<8x16xf32>
    %85 = vector.extract_strided_slice %75 {offsets = [8, 16], sizes = [8, 16], strides = [1, 1]} : vector<16x96xf32> to vector<8x16xf32>
    %86 = vector.extract_strided_slice %75 {offsets = [8, 48], sizes = [8, 16], strides = [1, 1]} : vector<16x96xf32> to vector<8x16xf32>
    %87 = vector.extract_strided_slice %75 {offsets = [8, 80], sizes = [8, 16], strides = [1, 1]} : vector<16x96xf32> to vector<8x16xf32>
    %88 = vector.shape_cast %76 : vector<8x16xf32> to vector<1x8x16xf32>
    %89 = vector.shape_cast %79 : vector<8x16xf32> to vector<1x8x16xf32>
    %90 = vector.shape_cast %82 : vector<8x16xf32> to vector<1x8x16xf32>
    %91 = vector.shape_cast %85 : vector<8x16xf32> to vector<1x8x16xf32>
    %92 = tpu.concatenate %88, %89, %90, %91 in 0 : vector<1x8x16xf32>, vector<1x8x16xf32>, vector<1x8x16xf32>, vector<1x8x16xf32> -> vector<4x8x16xf32>
    %93 = arith.truncf %92 : vector<4x8x16xf32> to vector<4x8x16xbf16>
    %94 = vector.shape_cast %77 : vector<8x16xf32> to vector<1x8x16xf32>
    %95 = vector.shape_cast %80 : vector<8x16xf32> to vector<1x8x16xf32>
    %96 = vector.shape_cast %83 : vector<8x16xf32> to vector<1x8x16xf32>
    %97 = vector.shape_cast %86 : vector<8x16xf32> to vector<1x8x16xf32>
    %98 = tpu.concatenate %94, %95, %96, %97 in 0 : vector<1x8x16xf32>, vector<1x8x16xf32>, vector<1x8x16xf32>, vector<1x8x16xf32> -> vector<4x8x16xf32>
    %99 = arith.truncf %98 : vector<4x8x16xf32> to vector<4x8x16xbf16>
    %100 = vector.shape_cast %78 : vector<8x16xf32> to vector<1x8x16xf32>
    %101 = vector.shape_cast %81 : vector<8x16xf32> to vector<1x8x16xf32>
    %102 = vector.shape_cast %84 : vector<8x16xf32> to vector<1x8x16xf32>
    %103 = vector.shape_cast %87 : vector<8x16xf32> to vector<1x8x16xf32>
    %104 = tpu.concatenate %100, %101, %102, %103 in 0 : vector<1x8x16xf32>, vector<1x8x16xf32>, vector<1x8x16xf32>, vector<1x8x16xf32> -> vector<4x8x16xf32>
    %105 = arith.truncf %104 : vector<4x8x16xf32> to vector<4x8x16xbf16>
    "tpu.trace_start"() <{level = 10 : i32, message = "nqd,nkd->nqk"}> : () -> ()
    %cst_32 = arith.constant dense<0.000000e+00> : vector<4x8x8xf32>
    %106 = tpu.matmul %93, %99, %cst_32 {dimension_numbers = #tpu.dot_dimension_numbers<[2], [2], [1], [1], [0, 0, 0, 1, 1, 1], [0], [0]>} : vector<4x8x16xbf16>, vector<4x8x16xbf16>, vector<4x8x8xf32> -> vector<4x8x8xf32>
    "tpu.trace_stop"() : () -> ()
    %cst_33 = arith.constant 2.500000e-01 : f32
    %107 = vector.broadcast %cst_33 : f32 to vector<4x8x8xf32>
    %108 = arith.mulf %106, %107 : vector<4x8x8xf32>
    %109 = vector.broadcast %37 : vector<4x1x8xf32> to vector<4x8x8xf32>
    %110 = arith.addf %108, %109 : vector<4x8x8xf32>
    %cst_34 = arith.constant dense<0xFF800000> : vector<4x8xf32>
    %111 = vector.multi_reduction <maximumf>, %110, %cst_34 [2] : vector<4x8x8xf32> to vector<4x8xf32>
    %112 = vector.shape_cast %111 : vector<4x8xf32> to vector<4x8x1xf32>
    %113 = vector.broadcast %112 : vector<4x8x1xf32> to vector<4x8x8xf32>
    %114 = arith.subf %110, %113 : vector<4x8x8xf32>
    %115 = math.exp %114 : vector<4x8x8xf32>
    %cst_35 = arith.constant dense<0.000000e+00> : vector<4x8xf32>
    %116 = vector.multi_reduction <add>, %115, %cst_35 [2] : vector<4x8x8xf32> to vector<4x8xf32>
    %117 = vector.shape_cast %116 : vector<4x8xf32> to vector<4x8x1xf32>
    %118 = tpu.reciprocal %117 {approx = true} : vector<4x8x1xf32> -> vector<4x8x1xf32>
    %119 = vector.broadcast %118 : vector<4x8x1xf32> to vector<4x8x8xf32>
    %120 = arith.mulf %115, %119 : vector<4x8x8xf32>
    %121 = arith.truncf %120 : vector<4x8x8xf32> to vector<4x8x8xbf16>
    "tpu.trace_start"() <{level = 10 : i32, message = "nqk,nkd->nqd"}> : () -> ()
    %cst_36 = arith.constant dense<0.000000e+00> : vector<4x8x16xf32>
    %122 = tpu.matmul %121, %105, %cst_36 {dimension_numbers = #tpu.dot_dimension_numbers<[2], [1], [1], [2], [0, 0, 0, 1, 1, 2], [0], [0]>} : vector<4x8x8xbf16>, vector<4x8x16xbf16>, vector<4x8x16xf32> -> vector<4x8x16xf32>
    "tpu.trace_stop"() : () -> ()
    %123 = vector.extract_strided_slice %122 {offsets = [0, 0, 0], sizes = [1, 8, 16], strides = [1, 1, 1]} : vector<4x8x16xf32> to vector<1x8x16xf32>
    %124 = vector.shape_cast %123 : vector<1x8x16xf32> to vector<8x16xf32>
    %125 = vector.extract_strided_slice %122 {offsets = [1, 0, 0], sizes = [1, 8, 16], strides = [1, 1, 1]} : vector<4x8x16xf32> to vector<1x8x16xf32>
    %126 = vector.shape_cast %125 : vector<1x8x16xf32> to vector<8x16xf32>
    %127 = tpu.concatenate %124, %126 in 1 : vector<8x16xf32>, vector<8x16xf32> -> vector<8x32xf32>
    %128 = vector.extract_strided_slice %122 {offsets = [2, 0, 0], sizes = [1, 8, 16], strides = [1, 1, 1]} : vector<4x8x16xf32> to vector<1x8x16xf32>
    %129 = vector.shape_cast %128 : vector<1x8x16xf32> to vector<8x16xf32>
    %130 = vector.extract_strided_slice %122 {offsets = [3, 0, 0], sizes = [1, 8, 16], strides = [1, 1, 1]} : vector<4x8x16xf32> to vector<1x8x16xf32>
    %131 = vector.shape_cast %130 : vector<1x8x16xf32> to vector<8x16xf32>
    %132 = tpu.concatenate %129, %131 in 1 : vector<8x16xf32>, vector<8x16xf32> -> vector<8x32xf32>
    %133 = tpu.concatenate %127, %132 in 0 : vector<8x32xf32>, vector<8x32xf32> -> vector<16x32xf32>
    %c0_37 = arith.constant 0 : index
    %c0_38 = arith.constant 0 : index
    %c0_39 = arith.constant 0 : index
    %134 = vector.load %arg6[%c0_37, %c0_38, %c0_39] : memref<2x32x32xbf16, #tpu.memory_space<vmem>>, vector<1x32x32xbf16>
    %135 = vector.shape_cast %134 : vector<1x32x32xbf16> to vector<32x32xbf16>
    %136 = arith.truncf %133 : vector<16x32xf32> to vector<16x32xbf16>
    %cst_40 = arith.constant dense<0.000000e+00> : vector<16x32xf32>
    %137 = tpu.matmul %136, %135, %cst_40 {dimension_numbers = #tpu.dot_dimension_numbers<[1], [0], [0], [1], [0, 0, 1, 1], [], []>} : vector<16x32xbf16>, vector<32x32xbf16>, vector<16x32xf32> -> vector<16x32xf32>
    %138 = vector.broadcast %63 : vector<1x32xf32> to vector<16x32xf32>
    %139 = arith.addf %137, %138 : vector<16x32xf32>
    %140 = arith.addf %139, %61 : vector<16x32xf32>
    %cst_41 = arith.constant dense<0.000000e+00> : vector<16xf32>
    %141 = vector.multi_reduction <add>, %140, %cst_41 [1] : vector<16x32xf32> to vector<16xf32>
    %142 = vector.shape_cast %141 : vector<16xf32> to vector<16x1xf32>
    %cst_42 = arith.constant 3.200000e+01 : f32
    %143 = vector.broadcast %cst_42 : f32 to vector<16x1xf32>
    %144 = arith.divf %142, %143 : vector<16x1xf32>
    %145 = arith.mulf %140, %140 : vector<16x32xf32>
    %cst_43 = arith.constant dense<0.000000e+00> : vector<16xf32>
    %146 = vector.multi_reduction <add>, %145, %cst_43 [1] : vector<16x32xf32> to vector<16xf32>
    %147 = vector.shape_cast %146 : vector<16xf32> to vector<16x1xf32>
    %cst_44 = arith.constant 3.200000e+01 : f32
    %148 = vector.broadcast %cst_44 : f32 to vector<16x1xf32>
    %149 = arith.divf %147, %148 : vector<16x1xf32>
    %150 = arith.mulf %144, %144 : vector<16x1xf32>
    %151 = arith.subf %149, %150 : vector<16x1xf32>
    %152 = vector.broadcast %144 : vector<16x1xf32> to vector<16x32xf32>
    %153 = arith.subf %140, %152 : vector<16x32xf32>
    %cst_45 = arith.constant 9.99999996E-13 : f32
    %154 = vector.broadcast %cst_45 : f32 to vector<16x1xf32>
    %155 = arith.addf %151, %154 : vector<16x1xf32>
    %156 = math.rsqrt %155 : vector<16x1xf32>
    %157 = vector.broadcast %156 : vector<16x1xf32> to vector<16x32xf32>
    %158 = arith.mulf %153, %157 : vector<16x32xf32>
    %159 = vector.broadcast %64 : vector<1x32xf32> to vector<16x32xf32>
    %160 = arith.mulf %158, %159 : vector<16x32xf32>
    %161 = vector.broadcast %65 : vector<1x32xf32> to vector<16x32xf32>
    %162 = arith.addf %160, %161 : vector<16x32xf32>
    %c0_46 = arith.constant 0 : index
    %c0_47 = arith.constant 0 : index
    %c0_48 = arith.constant 0 : index
    %163 = vector.load %arg7[%c0_46, %c0_47, %c0_48] : memref<2x32x64xbf16, #tpu.memory_space<vmem>>, vector<1x32x64xbf16>
    %164 = vector.shape_cast %163 : vector<1x32x64xbf16> to vector<32x64xbf16>
    %165 = arith.truncf %162 : vector<16x32xf32> to vector<16x32xbf16>
    %cst_49 = arith.constant dense<0.000000e+00> : vector<16x64xf32>
    %166 = tpu.matmul %165, %164, %cst_49 {dimension_numbers = #tpu.dot_dimension_numbers<[1], [0], [0], [1], [0, 0, 1, 1], [], []>} : vector<16x32xbf16>, vector<32x64xbf16>, vector<16x64xf32> -> vector<16x64xf32>
    %167 = vector.broadcast %66 : vector<1x64xf32> to vector<16x64xf32>
    %168 = arith.addf %166, %167 : vector<16x64xf32>
    %cst_50 = arith.constant 5.000000e-01 : f32
    %169 = vector.broadcast %cst_50 : f32 to vector<16x64xf32>
    %170 = arith.mulf %169, %168 : vector<16x64xf32>
    %cst_51 = arith.constant 4.471500e-02 : f32
    %171 = vector.broadcast %cst_51 : f32 to vector<16x64xf32>
    %172 = arith.mulf %171, %168 : vector<16x64xf32>
    %173 = arith.mulf %172, %168 : vector<16x64xf32>
    %174 = arith.mulf %173, %168 : vector<16x64xf32>
    %175 = arith.addf %168, %174 : vector<16x64xf32>
    %cst_52 = arith.constant 0.797884583 : f32
    %176 = vector.broadcast %cst_52 : f32 to vector<16x64xf32>
    %177 = arith.mulf %176, %175 : vector<16x64xf32>
    %178 = math.tanh %177 : vector<16x64xf32>
    %cst_53 = arith.constant 1.000000e+00 : f32
    %179 = vector.broadcast %cst_53 : f32 to vector<16x64xf32>
    %180 = arith.addf %179, %178 : vector<16x64xf32>
    %181 = arith.mulf %170, %180 : vector<16x64xf32>
    %c0_54 = arith.constant 0 : index
    %c0_55 = arith.constant 0 : index
    %c0_56 = arith.constant 0 : index
    %182 = vector.load %arg8[%c0_54, %c0_55, %c0_56] : memref<2x64x32xbf16, #tpu.memory_space<vmem>>, vector<1x64x32xbf16>
    %183 = vector.shape_cast %182 : vector<1x64x32xbf16> to vector<64x32xbf16>
    %184 = arith.truncf %181 : vector<16x64xf32> to vector<16x64xbf16>
    %cst_57 = arith.constant dense<0.000000e+00> : vector<16x32xf32>
    %185 = tpu.matmul %184, %183, %cst_57 {dimension_numbers = #tpu.dot_dimension_numbers<[1], [0], [0], [1], [0, 0, 1, 1], [], []>} : vector<16x64xbf16>, vector<64x32xbf16>, vector<16x32xf32> -> vector<16x32xf32>
    %186 = vector.broadcast %67 : vector<1x32xf32> to vector<16x32xf32>
    %187 = arith.addf %185, %186 : vector<16x32xf32>
    %188 = arith.addf %187, %162 : vector<16x32xf32>
    %cst_58 = arith.constant dense<0.000000e+00> : vector<16xf32>
    %189 = vector.multi_reduction <add>, %188, %cst_58 [1] : vector<16x32xf32> to vector<16xf32>
    %190 = vector.shape_cast %189 : vector<16xf32> to vector<16x1xf32>
    %cst_59 = arith.constant 3.200000e+01 : f32
    %191 = vector.broadcast %cst_59 : f32 to vector<16x1xf32>
    %192 = arith.divf %190, %191 : vector<16x1xf32>
    %193 = arith.mulf %188, %188 : vector<16x32xf32>
    %cst_60 = arith.constant dense<0.000000e+00> : vector<16xf32>
    %194 = vector.multi_reduction <add>, %193, %cst_60 [1] : vector<16x32xf32> to vector<16xf32>
    %195 = vector.shape_cast %194 : vector<16xf32> to vector<16x1xf32>
    %cst_61 = arith.constant 3.200000e+01 : f32
    %196 = vector.broadcast %cst_61 : f32 to vector<16x1xf32>
    %197 = arith.divf %195, %196 : vector<16x1xf32>
    %198 = arith.mulf %192, %192 : vector<16x1xf32>
    %199 = arith.subf %197, %198 : vector<16x1xf32>
    %200 = vector.broadcast %192 : vector<16x1xf32> to vector<16x32xf32>
    %201 = arith.subf %188, %200 : vector<16x32xf32>
    %cst_62 = arith.constant 9.99999996E-13 : f32
    %202 = vector.broadcast %cst_62 : f32 to vector<16x1xf32>
    %203 = arith.addf %199, %202 : vector<16x1xf32>
    %204 = math.rsqrt %203 : vector<16x1xf32>
    %205 = vector.broadcast %204 : vector<16x1xf32> to vector<16x32xf32>
    %206 = arith.mulf %201, %205 : vector<16x32xf32>
    %207 = vector.broadcast %68 : vector<1x32xf32> to vector<16x32xf32>
    %208 = arith.mulf %206, %207 : vector<16x32xf32>
    %209 = vector.broadcast %69 : vector<1x32xf32> to vector<16x32xf32>
    %210 = arith.addf %208, %209 : vector<16x32xf32>
    %c11 = arith.constant 11 : index
    %c0_63 = arith.constant 0 : index
    %211 = vector.load %arg4[%c11, %c0_63] : memref<19x128xf32, #tpu.memory_space<vmem>>, vector<1x96xf32>
    %c12 = arith.constant 12 : index
    %c0_64 = arith.constant 0 : index
    %212 = vector.load %arg4[%c12, %c0_64] : memref<19x128xf32, #tpu.memory_space<vmem>>, vector<1x32xf32>
    %c13 = arith.constant 13 : index
    %c0_65 = arith.constant 0 : index
    %213 = vector.load %arg4[%c13, %c0_65] : memref<19x128xf32, #tpu.memory_space<vmem>>, vector<1x32xf32>
    %c14 = arith.constant 14 : index
    %c0_66 = arith.constant 0 : index
    %214 = vector.load %arg4[%c14, %c0_66] : memref<19x128xf32, #tpu.memory_space<vmem>>, vector<1x32xf32>
    %c15 = arith.constant 15 : index
    %c0_67 = arith.constant 0 : index
    %215 = vector.load %arg4[%c15, %c0_67] : memref<19x128xf32, #tpu.memory_space<vmem>>, vector<1x64xf32>
    %c16 = arith.constant 16 : index
    %c0_68 = arith.constant 0 : index
    %216 = vector.load %arg4[%c16, %c0_68] : memref<19x128xf32, #tpu.memory_space<vmem>>, vector<1x32xf32>
    %c17 = arith.constant 17 : index
    %c0_69 = arith.constant 0 : index
    %217 = vector.load %arg4[%c17, %c0_69] : memref<19x128xf32, #tpu.memory_space<vmem>>, vector<1x32xf32>
    %c18 = arith.constant 18 : index
    %c0_70 = arith.constant 0 : index
    %218 = vector.load %arg4[%c18, %c0_70] : memref<19x128xf32, #tpu.memory_space<vmem>>, vector<1x32xf32>
    %c1_71 = arith.constant 1 : index
    %c0_72 = arith.constant 0 : index
    %c0_73 = arith.constant 0 : index
    %219 = vector.load %arg5[%c1_71, %c0_72, %c0_73] : memref<2x32x96xbf16, #tpu.memory_space<vmem>>, vector<1x32x96xbf16>
    %220 = vector.shape_cast %219 : vector<1x32x96xbf16> to vector<32x96xbf16>
    %221 = arith.truncf %210 : vector<16x32xf32> to vector<16x32xbf16>
    %cst_74 = arith.constant dense<0.000000e+00> : vector<16x96xf32>
    %222 = tpu.matmul %221, %220, %cst_74 {dimension_numbers = #tpu.dot_dimension_numbers<[1], [0], [0], [1], [0, 0, 1, 1], [], []>} : vector<16x32xbf16>, vector<32x96xbf16>, vector<16x96xf32> -> vector<16x96xf32>
    %223 = vector.broadcast %211 : vector<1x96xf32> to vector<16x96xf32>
    %224 = arith.addf %222, %223 : vector<16x96xf32>
    %225 = vector.extract_strided_slice %224 {offsets = [0, 0], sizes = [8, 16], strides = [1, 1]} : vector<16x96xf32> to vector<8x16xf32>
    %226 = vector.extract_strided_slice %224 {offsets = [0, 32], sizes = [8, 16], strides = [1, 1]} : vector<16x96xf32> to vector<8x16xf32>
    %227 = vector.extract_strided_slice %224 {offsets = [0, 64], sizes = [8, 16], strides = [1, 1]} : vector<16x96xf32> to vector<8x16xf32>
    %228 = vector.extract_strided_slice %224 {offsets = [0, 16], sizes = [8, 16], strides = [1, 1]} : vector<16x96xf32> to vector<8x16xf32>
    %229 = vector.extract_strided_slice %224 {offsets = [0, 48], sizes = [8, 16], strides = [1, 1]} : vector<16x96xf32> to vector<8x16xf32>
    %230 = vector.extract_strided_slice %224 {offsets = [0, 80], sizes = [8, 16], strides = [1, 1]} : vector<16x96xf32> to vector<8x16xf32>
    %231 = vector.extract_strided_slice %224 {offsets = [8, 0], sizes = [8, 16], strides = [1, 1]} : vector<16x96xf32> to vector<8x16xf32>
    %232 = vector.extract_strided_slice %224 {offsets = [8, 32], sizes = [8, 16], strides = [1, 1]} : vector<16x96xf32> to vector<8x16xf32>
    %233 = vector.extract_strided_slice %224 {offsets = [8, 64], sizes = [8, 16], strides = [1, 1]} : vector<16x96xf32> to vector<8x16xf32>
    %234 = vector.extract_strided_slice %224 {offsets = [8, 16], sizes = [8, 16], strides = [1, 1]} : vector<16x96xf32> to vector<8x16xf32>
    %235 = vector.extract_strided_slice %224 {offsets = [8, 48], sizes = [8, 16], strides = [1, 1]} : vector<16x96xf32> to vector<8x16xf32>
    %236 = vector.extract_strided_slice %224 {offsets = [8, 80], sizes = [8, 16], strides = [1, 1]} : vector<16x96xf32> to vector<8x16xf32>
    %237 = vector.shape_cast %225 : vector<8x16xf32> to vector<1x8x16xf32>
    %238 = vector.shape_cast %228 : vector<8x16xf32> to vector<1x8x16xf32>
    %239 = vector.shape_cast %231 : vector<8x16xf32> to vector<1x8x16xf32>
    %240 = vector.shape_cast %234 : vector<8x16xf32> to vector<1x8x16xf32>
    %241 = tpu.concatenate %237, %238, %239, %240 in 0 : vector<1x8x16xf32>, vector<1x8x16xf32>, vector<1x8x16xf32>, vector<1x8x16xf32> -> vector<4x8x16xf32>
    %242 = arith.truncf %241 : vector<4x8x16xf32> to vector<4x8x16xbf16>
    %243 = vector.shape_cast %226 : vector<8x16xf32> to vector<1x8x16xf32>
    %244 = vector.shape_cast %229 : vector<8x16xf32> to vector<1x8x16xf32>
    %245 = vector.shape_cast %232 : vector<8x16xf32> to vector<1x8x16xf32>
    %246 = vector.shape_cast %235 : vector<8x16xf32> to vector<1x8x16xf32>
    %247 = tpu.concatenate %243, %244, %245, %246 in 0 : vector<1x8x16xf32>, vector<1x8x16xf32>, vector<1x8x16xf32>, vector<1x8x16xf32> -> vector<4x8x16xf32>
    %248 = arith.truncf %247 : vector<4x8x16xf32> to vector<4x8x16xbf16>
    %249 = vector.shape_cast %227 : vector<8x16xf32> to vector<1x8x16xf32>
    %250 = vector.shape_cast %230 : vector<8x16xf32> to vector<1x8x16xf32>
    %251 = vector.shape_cast %233 : vector<8x16xf32> to vector<1x8x16xf32>
    %252 = vector.shape_cast %236 : vector<8x16xf32> to vector<1x8x16xf32>
    %253 = tpu.concatenate %249, %250, %251, %252 in 0 : vector<1x8x16xf32>, vector<1x8x16xf32>, vector<1x8x16xf32>, vector<1x8x16xf32> -> vector<4x8x16xf32>
    %254 = arith.truncf %253 : vector<4x8x16xf32> to vector<4x8x16xbf16>
    "tpu.trace_start"() <{level = 10 : i32, message = "nqd,nkd->nqk"}> : () -> ()
    %cst_75 = arith.constant dense<0.000000e+00> : vector<4x8x8xf32>
    %255 = tpu.matmul %242, %248, %cst_75 {dimension_numbers = #tpu.dot_dimension_numbers<[2], [2], [1], [1], [0, 0, 0, 1, 1, 1], [0], [0]>} : vector<4x8x16xbf16>, vector<4x8x16xbf16>, vector<4x8x8xf32> -> vector<4x8x8xf32>
    "tpu.trace_stop"() : () -> ()
    %cst_76 = arith.constant 2.500000e-01 : f32
    %256 = vector.broadcast %cst_76 : f32 to vector<4x8x8xf32>
    %257 = arith.mulf %255, %256 : vector<4x8x8xf32>
    %258 = vector.broadcast %37 : vector<4x1x8xf32> to vector<4x8x8xf32>
    %259 = arith.addf %257, %258 : vector<4x8x8xf32>
    %cst_77 = arith.constant dense<0xFF800000> : vector<4x8xf32>
    %260 = vector.multi_reduction <maximumf>, %259, %cst_77 [2] : vector<4x8x8xf32> to vector<4x8xf32>
    %261 = vector.shape_cast %260 : vector<4x8xf32> to vector<4x8x1xf32>
    %262 = vector.broadcast %261 : vector<4x8x1xf32> to vector<4x8x8xf32>
    %263 = arith.subf %259, %262 : vector<4x8x8xf32>
    %264 = math.exp %263 : vector<4x8x8xf32>
    %cst_78 = arith.constant dense<0.000000e+00> : vector<4x8xf32>
    %265 = vector.multi_reduction <add>, %264, %cst_78 [2] : vector<4x8x8xf32> to vector<4x8xf32>
    %266 = vector.shape_cast %265 : vector<4x8xf32> to vector<4x8x1xf32>
    %267 = tpu.reciprocal %266 {approx = true} : vector<4x8x1xf32> -> vector<4x8x1xf32>
    %268 = vector.broadcast %267 : vector<4x8x1xf32> to vector<4x8x8xf32>
    %269 = arith.mulf %264, %268 : vector<4x8x8xf32>
    %270 = arith.truncf %269 : vector<4x8x8xf32> to vector<4x8x8xbf16>
    "tpu.trace_start"() <{level = 10 : i32, message = "nqk,nkd->nqd"}> : () -> ()
    %cst_79 = arith.constant dense<0.000000e+00> : vector<4x8x16xf32>
    %271 = tpu.matmul %270, %254, %cst_79 {dimension_numbers = #tpu.dot_dimension_numbers<[2], [1], [1], [2], [0, 0, 0, 1, 1, 2], [0], [0]>} : vector<4x8x8xbf16>, vector<4x8x16xbf16>, vector<4x8x16xf32> -> vector<4x8x16xf32>
    "tpu.trace_stop"() : () -> ()
    %272 = vector.extract_strided_slice %271 {offsets = [0, 0, 0], sizes = [1, 8, 16], strides = [1, 1, 1]} : vector<4x8x16xf32> to vector<1x8x16xf32>
    %273 = vector.shape_cast %272 : vector<1x8x16xf32> to vector<8x16xf32>
    %274 = vector.extract_strided_slice %271 {offsets = [1, 0, 0], sizes = [1, 8, 16], strides = [1, 1, 1]} : vector<4x8x16xf32> to vector<1x8x16xf32>
    %275 = vector.shape_cast %274 : vector<1x8x16xf32> to vector<8x16xf32>
    %276 = tpu.concatenate %273, %275 in 1 : vector<8x16xf32>, vector<8x16xf32> -> vector<8x32xf32>
    %277 = vector.extract_strided_slice %271 {offsets = [2, 0, 0], sizes = [1, 8, 16], strides = [1, 1, 1]} : vector<4x8x16xf32> to vector<1x8x16xf32>
    %278 = vector.shape_cast %277 : vector<1x8x16xf32> to vector<8x16xf32>
    %279 = vector.extract_strided_slice %271 {offsets = [3, 0, 0], sizes = [1, 8, 16], strides = [1, 1, 1]} : vector<4x8x16xf32> to vector<1x8x16xf32>
    %280 = vector.shape_cast %279 : vector<1x8x16xf32> to vector<8x16xf32>
    %281 = tpu.concatenate %278, %280 in 1 : vector<8x16xf32>, vector<8x16xf32> -> vector<8x32xf32>
    %282 = tpu.concatenate %276, %281 in 0 : vector<8x32xf32>, vector<8x32xf32> -> vector<16x32xf32>
    %c1_80 = arith.constant 1 : index
    %c0_81 = arith.constant 0 : index
    %c0_82 = arith.constant 0 : index
    %283 = vector.load %arg6[%c1_80, %c0_81, %c0_82] : memref<2x32x32xbf16, #tpu.memory_space<vmem>>, vector<1x32x32xbf16>
    %284 = vector.shape_cast %283 : vector<1x32x32xbf16> to vector<32x32xbf16>
    %285 = arith.truncf %282 : vector<16x32xf32> to vector<16x32xbf16>
    %cst_83 = arith.constant dense<0.000000e+00> : vector<16x32xf32>
    %286 = tpu.matmul %285, %284, %cst_83 {dimension_numbers = #tpu.dot_dimension_numbers<[1], [0], [0], [1], [0, 0, 1, 1], [], []>} : vector<16x32xbf16>, vector<32x32xbf16>, vector<16x32xf32> -> vector<16x32xf32>
    %287 = vector.broadcast %212 : vector<1x32xf32> to vector<16x32xf32>
    %288 = arith.addf %286, %287 : vector<16x32xf32>
    %289 = arith.addf %288, %210 : vector<16x32xf32>
    %cst_84 = arith.constant dense<0.000000e+00> : vector<16xf32>
    %290 = vector.multi_reduction <add>, %289, %cst_84 [1] : vector<16x32xf32> to vector<16xf32>
    %291 = vector.shape_cast %290 : vector<16xf32> to vector<16x1xf32>
    %cst_85 = arith.constant 3.200000e+01 : f32
    %292 = vector.broadcast %cst_85 : f32 to vector<16x1xf32>
    %293 = arith.divf %291, %292 : vector<16x1xf32>
    %294 = arith.mulf %289, %289 : vector<16x32xf32>
    %cst_86 = arith.constant dense<0.000000e+00> : vector<16xf32>
    %295 = vector.multi_reduction <add>, %294, %cst_86 [1] : vector<16x32xf32> to vector<16xf32>
    %296 = vector.shape_cast %295 : vector<16xf32> to vector<16x1xf32>
    %cst_87 = arith.constant 3.200000e+01 : f32
    %297 = vector.broadcast %cst_87 : f32 to vector<16x1xf32>
    %298 = arith.divf %296, %297 : vector<16x1xf32>
    %299 = arith.mulf %293, %293 : vector<16x1xf32>
    %300 = arith.subf %298, %299 : vector<16x1xf32>
    %301 = vector.broadcast %293 : vector<16x1xf32> to vector<16x32xf32>
    %302 = arith.subf %289, %301 : vector<16x32xf32>
    %cst_88 = arith.constant 9.99999996E-13 : f32
    %303 = vector.broadcast %cst_88 : f32 to vector<16x1xf32>
    %304 = arith.addf %300, %303 : vector<16x1xf32>
    %305 = math.rsqrt %304 : vector<16x1xf32>
    %306 = vector.broadcast %305 : vector<16x1xf32> to vector<16x32xf32>
    %307 = arith.mulf %302, %306 : vector<16x32xf32>
    %308 = vector.broadcast %213 : vector<1x32xf32> to vector<16x32xf32>
    %309 = arith.mulf %307, %308 : vector<16x32xf32>
    %310 = vector.broadcast %214 : vector<1x32xf32> to vector<16x32xf32>
    %311 = arith.addf %309, %310 : vector<16x32xf32>
    %c1_89 = arith.constant 1 : index
    %c0_90 = arith.constant 0 : index
    %c0_91 = arith.constant 0 : index
    %312 = vector.load %arg7[%c1_89, %c0_90, %c0_91] : memref<2x32x64xbf16, #tpu.memory_space<vmem>>, vector<1x32x64xbf16>
    %313 = vector.shape_cast %312 : vector<1x32x64xbf16> to vector<32x64xbf16>
    %314 = arith.truncf %311 : vector<16x32xf32> to vector<16x32xbf16>
    %cst_92 = arith.constant dense<0.000000e+00> : vector<16x64xf32>
    %315 = tpu.matmul %314, %313, %cst_92 {dimension_numbers = #tpu.dot_dimension_numbers<[1], [0], [0], [1], [0, 0, 1, 1], [], []>} : vector<16x32xbf16>, vector<32x64xbf16>, vector<16x64xf32> -> vector<16x64xf32>
    %316 = vector.broadcast %215 : vector<1x64xf32> to vector<16x64xf32>
    %317 = arith.addf %315, %316 : vector<16x64xf32>
    %cst_93 = arith.constant 5.000000e-01 : f32
    %318 = vector.broadcast %cst_93 : f32 to vector<16x64xf32>
    %319 = arith.mulf %318, %317 : vector<16x64xf32>
    %cst_94 = arith.constant 4.471500e-02 : f32
    %320 = vector.broadcast %cst_94 : f32 to vector<16x64xf32>
    %321 = arith.mulf %320, %317 : vector<16x64xf32>
    %322 = arith.mulf %321, %317 : vector<16x64xf32>
    %323 = arith.mulf %322, %317 : vector<16x64xf32>
    %324 = arith.addf %317, %323 : vector<16x64xf32>
    %cst_95 = arith.constant 0.797884583 : f32
    %325 = vector.broadcast %cst_95 : f32 to vector<16x64xf32>
    %326 = arith.mulf %325, %324 : vector<16x64xf32>
    %327 = math.tanh %326 : vector<16x64xf32>
    %cst_96 = arith.constant 1.000000e+00 : f32
    %328 = vector.broadcast %cst_96 : f32 to vector<16x64xf32>
    %329 = arith.addf %328, %327 : vector<16x64xf32>
    %330 = arith.mulf %319, %329 : vector<16x64xf32>
    %c1_97 = arith.constant 1 : index
    %c0_98 = arith.constant 0 : index
    %c0_99 = arith.constant 0 : index
    %331 = vector.load %arg8[%c1_97, %c0_98, %c0_99] : memref<2x64x32xbf16, #tpu.memory_space<vmem>>, vector<1x64x32xbf16>
    %332 = vector.shape_cast %331 : vector<1x64x32xbf16> to vector<64x32xbf16>
    %333 = arith.truncf %330 : vector<16x64xf32> to vector<16x64xbf16>
    %cst_100 = arith.constant dense<0.000000e+00> : vector<16x32xf32>
    %334 = tpu.matmul %333, %332, %cst_100 {dimension_numbers = #tpu.dot_dimension_numbers<[1], [0], [0], [1], [0, 0, 1, 1], [], []>} : vector<16x64xbf16>, vector<64x32xbf16>, vector<16x32xf32> -> vector<16x32xf32>
    %335 = vector.broadcast %216 : vector<1x32xf32> to vector<16x32xf32>
    %336 = arith.addf %334, %335 : vector<16x32xf32>
    %337 = arith.addf %336, %311 : vector<16x32xf32>
    %cst_101 = arith.constant dense<0.000000e+00> : vector<16xf32>
    %338 = vector.multi_reduction <add>, %337, %cst_101 [1] : vector<16x32xf32> to vector<16xf32>
    %339 = vector.shape_cast %338 : vector<16xf32> to vector<16x1xf32>
    %cst_102 = arith.constant 3.200000e+01 : f32
    %340 = vector.broadcast %cst_102 : f32 to vector<16x1xf32>
    %341 = arith.divf %339, %340 : vector<16x1xf32>
    %342 = arith.mulf %337, %337 : vector<16x32xf32>
    %cst_103 = arith.constant dense<0.000000e+00> : vector<16xf32>
    %343 = vector.multi_reduction <add>, %342, %cst_103 [1] : vector<16x32xf32> to vector<16xf32>
    %344 = vector.shape_cast %343 : vector<16xf32> to vector<16x1xf32>
    %cst_104 = arith.constant 3.200000e+01 : f32
    %345 = vector.broadcast %cst_104 : f32 to vector<16x1xf32>
    %346 = arith.divf %344, %345 : vector<16x1xf32>
    %347 = arith.mulf %341, %341 : vector<16x1xf32>
    %348 = arith.subf %346, %347 : vector<16x1xf32>
    %349 = vector.broadcast %341 : vector<16x1xf32> to vector<16x32xf32>
    %350 = arith.subf %337, %349 : vector<16x32xf32>
    %cst_105 = arith.constant 9.99999996E-13 : f32
    %351 = vector.broadcast %cst_105 : f32 to vector<16x1xf32>
    %352 = arith.addf %348, %351 : vector<16x1xf32>
    %353 = math.rsqrt %352 : vector<16x1xf32>
    %354 = vector.broadcast %353 : vector<16x1xf32> to vector<16x32xf32>
    %355 = arith.mulf %350, %354 : vector<16x32xf32>
    %356 = vector.broadcast %217 : vector<1x32xf32> to vector<16x32xf32>
    %357 = arith.mulf %355, %356 : vector<16x32xf32>
    %358 = vector.broadcast %218 : vector<1x32xf32> to vector<16x32xf32>
    %359 = arith.addf %357, %358 : vector<16x32xf32>
    %c2 = arith.constant 2 : index
    %c0_106 = arith.constant 0 : index
    %360 = vector.load %arg4[%c2, %c0_106] : memref<19x128xf32, #tpu.memory_space<vmem>>, vector<1x128xf32>
    %c0_107 = arith.constant 0 : index
    %c0_108 = arith.constant 0 : index
    %361 = vector.load %arg9[%c0_107, %c0_108] : memref<32x128xbf16, #tpu.memory_space<vmem>>, vector<32x128xbf16>
    %362 = arith.truncf %359 : vector<16x32xf32> to vector<16x32xbf16>
    %cst_109 = arith.constant dense<0.000000e+00> : vector<16x128xf32>
    %363 = tpu.matmul %362, %361, %cst_109 {dimension_numbers = #tpu.dot_dimension_numbers<[1], [0], [0], [1], [0, 0, 1, 1], [], []>} : vector<16x32xbf16>, vector<32x128xbf16>, vector<16x128xf32> -> vector<16x128xf32>
    %364 = vector.broadcast %360 : vector<1x128xf32> to vector<16x128xf32>
    %365 = arith.addf %363, %364 : vector<16x128xf32>
    %c0_110 = arith.constant 0 : index
    %c0_111 = arith.constant 0 : index
    %366 = vector.load %arg10[%c0_110, %c0_111] : memref<16x128xf32, #tpu.memory_space<vmem>>, vector<16x128xf32>
    tpu.vector_store %arg10[%c0_110, %c0_111], %365 {strides = array<i32>} : memref<16x128xf32, #tpu.memory_space<vmem>>, vector<16x128xf32>,
    return
  }
  func.func @transform_0(%arg0: i32) -> (i32, i32) {
    %c0_i32 = arith.constant 0 : i32
    %c0_i32_0 = arith.constant 0 : i32
    %c0_i32_1 = arith.constant 0 : i32
    return %c0_i32, %c0_i32_0 : i32, i32
  }
  func.func @transform_1(%arg0: i32) -> (i32, i32) {
    %c0_i32 = arith.constant 0 : i32
    %c0_i32_0 = arith.constant 0 : i32
    %c0_i32_1 = arith.constant 0 : i32
    return %c0_i32, %c0_i32_0 : i32, i32
  }
  func.func @transform_2(%arg0: i32) -> (i32, i32) {
    %c0_i32 = arith.constant 0 : i32
    %c0_i32_0 = arith.constant 0 : i32
    %c0_i32_1 = arith.constant 0 : i32
    return %c0_i32, %c0_i32_0 : i32, i32
  }
  func.func @transform_3(%arg0: i32) -> (i32, i32) {
    %c0_i32 = arith.constant 0 : i32
    %c0_i32_0 = arith.constant 0 : i32
    %c0_i32_1 = arith.constant 0 : i32
    return %c0_i32, %c0_i32_0 : i32, i32
  }
  func.func @transform_4(%arg0: i32) -> (i32, i32, i32) {
    %c0_i32 = arith.constant 0 : i32
    %c0_i32_0 = arith.constant 0 : i32
    %c0_i32_1 = arith.constant 0 : i32
    %c0_i32_2 = arith.constant 0 : i32
    return %c0_i32, %c0_i32_0, %c0_i32_1 : i32, i32, i32
  }
  func.func @transform_5(%arg0: i32) -> (i32, i32, i32) {
    %c0_i32 = arith.constant 0 : i32
    %c0_i32_0 = arith.constant 0 : i32
    %c0_i32_1 = arith.constant 0 : i32
    %c0_i32_2 = arith.constant 0 : i32
    return %c0_i32, %c0_i32_0, %c0_i32_1 : i32, i32, i32
  }
  func.func @transform_6(%arg0: i32) -> (i32, i32, i32) {
    %c0_i32 = arith.constant 0 : i32
    %c0_i32_0 = arith.constant 0 : i32
    %c0_i32_1 = arith.constant 0 : i32
    %c0_i32_2 = arith.constant 0 : i32
    return %c0_i32, %c0_i32_0, %c0_i32_1 : i32, i32, i32
  }
  func.func @transform_7(%arg0: i32) -> (i32, i32, i32) {
    %c0_i32 = arith.constant 0 : i32
    %c0_i32_0 = arith.constant 0 : i32
    %c0_i32_1 = arith.constant 0 : i32
    %c0_i32_2 = arith.constant 0 : i32
    return %c0_i32, %c0_i32_0, %c0_i32_1 : i32, i32, i32
  }
  func.func @transform_8(%arg0: i32) -> (i32, i32) {
    %c0_i32 = arith.constant 0 : i32
    %c0_i32_0 = arith.constant 0 : i32
    %c0_i32_1 = arith.constant 0 : i32
    return %c0_i32, %c0_i32_0 : i32, i32
  }
  func.func @transform_9(%arg0: i32) -> (i32, i32) {
    %c0_i32 = arith.constant 0 : i32
    %c0_i32_0 = arith.constant 0 : i32
    %c0_i32_1 = arith.constant 0 : i32
    return %c0_i32, %c0_i32_0 : i32, i32
  }
}

</mosaic_0001>

<llo_original>
// kernel: bert_seq_tok_forward.1
$region0: #{bert_seq_tok_forward.1}
  #allocation0 [shape = 'u32[]', space=smem, size = 0x4, offset = 0x4, fixed_abs, tag = 'smem constant byte address 0x4 - core index']
  #allocation1 [shape = 'u32[72,128]{1,0:T(1,128)}', space=vmem, size = 0x9000, scoped, tag = 'internal scratch']
  %s0 = inlined_call_operand.vmem [shape: s32[16,2], index: 0, kind: input, shape index: {}]
  %s1 = inlined_call_operand.vmem [shape: f32[2,8], index: 1, kind: input, shape index: {}]
  %s2 = inlined_call_operand.vmem [shape: f32[166,32], index: 2, kind: input, shape index: {}]
  %s3 = inlined_call_operand.vmem [shape: f32[19,128], index: 3, kind: input, shape index: {}]
  %s4 = inlined_call_operand.vmem [shape: bf16[2,32,96], index: 4, kind: input, shape index: {}]
  %s5 = inlined_call_operand.vmem [shape: bf16[2,32,32], index: 5, kind: input, shape index: {}]
  %s6 = inlined_call_operand.vmem [shape: bf16[2,32,64], index: 6, kind: input, shape index: {}]
  %s7 = inlined_call_operand.vmem [shape: bf16[2,64,32], index: 7, kind: input, shape index: {}]
  %s8 = inlined_call_operand.vmem [shape: bf16[32,128], index: 8, kind: input, shape index: {}]
  %s9 = inlined_call_operand.vmem [shape: f32[16,128], index: 9, kind: output, shape index: {}]
  %s10 = sld [smem:[#allocation0]]
  $region46: #{bert_seq_tok_forward.1} parent=0
    _
  %s12 = ssub.s32 1, %s10
  %s13 = scalar_select 0, %s12, %s10
  // Predicated region
  $region2: #{bert_seq_tok_forward.1} parent=0 // pred_check
    _
  $region3: #{bert_seq_tok_forward.1} parent=0 // pred_check_branch
    %15 = sbr.rel (0) target = $region5
  $region4: #{bert_seq_tok_forward.1} parent=0 // pred_region
    _
  $region5: #{bert_seq_tok_forward.1} parent=0 // pred_fallthru
    _
  // Predicated region
  $region6: #{bert_seq_tok_forward.1} parent=0 // pred_check
    _
  $region7: #{bert_seq_tok_forward.1} parent=0 // pred_check_branch
    %17 = sbr.rel (0) target = $region9
  $region8: #{bert_seq_tok_forward.1} parent=0 // pred_region
    _
  $region9: #{bert_seq_tok_forward.1} parent=0 // pred_fallthru
    _
  // Predicated region
  $region10: #{bert_seq_tok_forward.1} parent=0 // pred_check
    _
  $region11: #{bert_seq_tok_forward.1} parent=0 // pred_check_branch
    %19 = sbr.rel (0) target = $region13
  $region12: #{bert_seq_tok_forward.1} parent=0 // pred_region
    _
  $region13: #{bert_seq_tok_forward.1} parent=0 // pred_fallthru
    _
  // Predicated region
  $region14: #{bert_seq_tok_forward.1} parent=0 // pred_check
    _
  $region15: #{bert_seq_tok_forward.1} parent=0 // pred_check_branch
    %21 = sbr.rel (0) target = $region17
  $region16: #{bert_seq_tok_forward.1} parent=0 // pred_region
    _
  $region17: #{bert_seq_tok_forward.1} parent=0 // pred_fallthru
    _
  // Predicated region
  $region18: #{bert_seq_tok_forward.1} parent=0 // pred_check
    _
  $region19: #{bert_seq_tok_forward.1} parent=0 // pred_check_branch
    %23 = sbr.rel (0) target = $region21
  $region20: #{bert_seq_tok_forward.1} parent=0 // pred_region
    _
  $region21: #{bert_seq_tok_forward.1} parent=0 // pred_fallthru
    _
  // Predicated region
  $region22: #{bert_seq_tok_forward.1} parent=0 // pred_check
    _
  $region23: #{bert_seq_tok_forward.1} parent=0 // pred_check_branch
    %25 = sbr.rel (0) target = $region25
  $region24: #{bert_seq_tok_forward.1} parent=0 // pred_region
    _
  $region25: #{bert_seq_tok_forward.1} parent=0 // pred_fallthru
    _
  // Predicated region
  $region26: #{bert_seq_tok_forward.1} parent=0 // pred_check
    _
  $region27: #{bert_seq_tok_forward.1} parent=0 // pred_check_branch
    %27 = sbr.rel (0) target = $region29
  $region28: #{bert_seq_tok_forward.1} parent=0 // pred_region
    _
  $region29: #{bert_seq_tok_forward.1} parent=0 // pred_fallthru
    _
  // Predicated region
  $region30: #{bert_seq_tok_forward.1} parent=0 // pred_check
    _
  $region31: #{bert_seq_tok_forward.1} parent=0 // pred_check_branch
    %29 = sbr.rel (0) target = $region33
  $region32: #{bert_seq_tok_forward.1} parent=0 // pred_region
    _
  $region33: #{bert_seq_tok_forward.1} parent=0 // pred_fallthru
    _
  // Predicated region
  $region34: #{bert_seq_tok_forward.1} parent=0 // pred_check
    _
  $region35: #{bert_seq_tok_forward.1} parent=0 // pred_check_branch
    %31 = sbr.rel (0) target = $region37
  $region36: #{bert_seq_tok_forward.1} parent=0 // pred_region
    _
  $region37: #{bert_seq_tok_forward.1} parent=0 // pred_fallthru
    _
  %v33 = vld [vmem:[%s0] sm:$0xff]
  %v34 = vld [vmem:[%s0 + $0x8] sm:$0xff]
  %v35 = vlaneseq
  %v36 = vand.u32 %v35, 127
  %37 = vset.pattern.permute.xlu0 0
  %38 = vperm.xlu0 %37, %v33
  %v39 = vpop.permute.xlu0 %38
  %40 = vset.pattern.permute.xlu0 0
  %41 = vperm.xlu0 %40, %v34
  %v42 = vpop.permute.xlu0 %41
  %vm43 = vcmp.eq.s32.totalorder %v36, %v39
  %vm44 = vcmp.eq.s32.totalorder %v36, %v42
  %v45 = vsel %vm43, 1, 0
  %v46 = vsel %vm44, 1, 0
  %v47 = vcvt.s32.f32 %v45
  %v48 = vcvt.s32.f32 %v46
  %v49 = vld [vmem:[%s2] sm:$0xff]
  %v50 = vld [vmem:[%s2 + $0x8] sm:$0xff]
  %v51 = vld [vmem:[%s2 + $0x10] sm:$0xff]
  %v52 = vld [vmem:[%s2 + $0x18] sm:$0xff]
  %v53 = vld [vmem:[%s2 + $0x20] sm:$0xff]
  %v54 = vld [vmem:[%s2 + $0x28] sm:$0xff]
  %v55 = vld [vmem:[%s2 + $0x30] sm:$0xff]
  %v56 = vld [vmem:[%s2 + $0x38] sm:$0xff]
  %v57 = vld [vmem:[%s2 + $0x40] sm:$0xff]
  %v58 = vld [vmem:[%s2 + $0x48] sm:$0xff]
  %v59 = vld [vmem:[%s2 + $0x50] sm:$0xff]
  %v60 = vld [vmem:[%s2 + $0x58] sm:$0xff]
  %v61 = vld [vmem:[%s2 + $0x60] sm:$0xf]
  %v62 = vld [vmem:[%s2 + $0x64] sm:$0xff]
  %v63 = vld [vmem:[%s2 + $0xa4] sm:$0x1]
  %v64 = vld [vmem:[%s2 + $0xa5] sm:$0x1]
  %vm65 = vcmp.eq.s32.totalorder %v33, 0
  %vm66 = vcmp.eq.s32.totalorder %v34, 0
  %v67 = vsel %vm65, 1, 0
  %v68 = vsel %vm66, 1, 0
  %69 = vset.pattern.permute.xlu0 1
  %70 = vperm.xlu0 %69, %v67
  %v71 = vpop.permute.xlu0 %70
  %72 = vset.pattern.permute.xlu0 1
  %73 = vperm.xlu0 %72, %v68
  %v74 = vpop.permute.xlu0 %73
  %vm75 = vcmp.eq.s32.totalorder %v71, 1
  %vm76 = vcmp.eq.s32.totalorder %v74, 1
  %v77 = vperm.slane %v63, 0
  %v78 = vperm.slane %v64, 0
  %v79 = vsel %vm75, %v77, %v78
  %v80 = vsel %vm76, %v77, %v78
  %vm81 = vcmask 818176
  %v83 = vsel %vm81, %v47, 0
  %v86 = vsel %vm81, %v48, 0
  %vm88 = vcmask 1043456
  %v90 = vsel %vm88, %v61, 0
  %92 = vmatpush.msra.mxu0 0.0
  %93 = vmatpush.msra.mxu0 0.0
  %94 = vmatpush.msra.mxu0 0.0
  %95 = vmatpush.msra.mxu0 %v90
  %96 = vmatpush.msra.mxu0 %v60
  %97 = vmatpush.msra.mxu0 %v59
  %98 = vmatpush.msra.mxu0 %v58
  %99 = vmatpush.msra.mxu0 %v57
  %100 = vmatpush.msra.mxu0 %v56
  %101 = vmatpush.msra.mxu0 %v55
  %102 = vmatpush.msra.mxu0 %v54
  %103 = vmatpush.msra.mxu0 %v53
  %104 = vmatpush.msra.mxu0 %v52
  %105 = vmatpush.msra.mxu0 %v51
  %106 = vmatpush.msra.mxu0 %v50
  %107 = vmatpush.msra.mxu0 %v49
  %108 = vmatmul.f32.gmra.mxu0 %v83
  %v109 = vpop.f32.mrf.mxu0
  %v110 = vadd.f32 %v62, %v109
  %111 = vmatmul.f32.gmra.mxu0 %v86
  %v112 = vpop.f32.mrf.mxu0
  %v113 = vadd.f32 %v62, %v112
  %114 = vdwg.mxu0
  %v115 = vadd.f32 %v110, %v79
  %v116 = vadd.f32 %v113, %v80
  %v117 = vld [vmem:[%s1] sm:$0x3]
  %v118 = vsub.f32 1.0, %v117
  %v119 = vmul.f32 %v118, -1e+09
  %v121 = vrot.slane %v119, 1
  %v123 = vld [vmem:[%s3] sm:$0x1]
  %v124 = vld [vmem:[%s3 + $0x1] sm:$0x1]
  %vm125 = vcmask 261120
  %v126 = vsel %vm125, %v115, 0.0
  %127 = vadd.xlane.f32.xlu0 %v126
  %v128 = vpop.xlane.xlu0 %127
  %v129 = vsel %vm125, %v116, 0.0
  %130 = vadd.xlane.f32.xlu0 %v129
  %v131 = vpop.xlane.xlu0 %130
  %v132 = vrcp.pop 32.0
  %v133 = vmul.f32 32.0, %v132
  %v134 = vsub.f32 1.0, %v133
  %v135 = vmul.f32 %v132, %v134
  %v136 = vadd.f32 %v132, %v135
  %vm137 = vweird.f32 %v132
  %v138 = vsel %vm137, %v132, %v136
  %v139 = vmul.f32 %v128, %v138
  %v140 = vmul.f32 %v131, %v138
  %v141 = vmul.f32 %v115, %v115
  %v142 = vmul.f32 %v116, %v116
  %v143 = vsel %vm125, %v141, 0.0
  %144 = vadd.xlane.f32.xlu0 %v143
  %v145 = vpop.xlane.xlu0 %144
  %v146 = vsel %vm125, %v142, 0.0
  %147 = vadd.xlane.f32.xlu0 %v146
  %v148 = vpop.xlane.xlu0 %147
  %v149 = vmul.f32 %v145, %v138
  %v150 = vmul.f32 %v148, %v138
  %v151 = vmul.f32 %v139, %v139
  %v152 = vmul.f32 %v140, %v140
  %v153 = vsub.f32 %v149, %v151
  %v154 = vsub.f32 %v150, %v152
  %v155 = vsub.f32 %v115, %v139
  %v156 = vsub.f32 %v116, %v140
  %v157 = vadd.f32 %v153, 1e-12
  %v158 = vadd.f32 %v154, 1e-12
  %v159 = vrsqrt.pop %v157
  %v160 = vmul.f32 %v159, %v157
  %v161 = vmul.f32 %v160, %v159
  %v162 = vmul.f32 0.5, %v161
  %v163 = vsub.f32 1.5, %v162
  %v164 = vmul.f32 %v159, %v163
  %vm165 = vweird.f32 %v157
  %vm166 = vweird.f32 %v159
  %vm167 = vmor %vm165, %vm166
  %v168 = vsel %vm167, %v159, %v164
  %v169 = vrsqrt.pop %v158
  %v170 = vmul.f32 %v169, %v158
  %v171 = vmul.f32 %v170, %v169
  %v172 = vmul.f32 0.5, %v171
  %v173 = vsub.f32 1.5, %v172
  %v174 = vmul.f32 %v169, %v173
  %vm175 = vweird.f32 %v158
  %vm176 = vweird.f32 %v169
  %vm177 = vmor %vm175, %vm176
  %v178 = vsel %vm177, %v169, %v174
  %v179 = vmul.f32 %v155, %v168
  %v180 = vmul.f32 %v156, %v178
  %v181 = vperm.slane %v123, 0
  %v182 = vmul.f32 %v179, %v181
  %v183 = vmul.f32 %v180, %v181
  %v184 = vperm.slane %v124, 0
  %v185 = vadd.f32 %v182, %v184
  %v186 = vadd.f32 %v183, %v184
  %v187 = vld [vmem:[%s3 + $0x3] sm:$0x1]
  %v188 = vld [vmem:[%s3 + $0x4] sm:$0x1]
  %v189 = vld [vmem:[%s3 + $0x5] sm:$0x1]
  %v190 = vld [vmem:[%s3 + $0x6] sm:$0x1]
  %v191 = vld [vmem:[%s3 + $0x7] sm:$0x1]
  %v192 = vld [vmem:[%s3 + $0x8] sm:$0x1]
  %v193 = vld [vmem:[%s3 + $0x9] sm:$0x1]
  %v194 = vld [vmem:[%s3 + $0xa] sm:$0x1]
  %v195 = vld [vmem:[%s4] sm:$0xf]
  %v196 = vld [vmem:[%s4 + $0x4] sm:$0xf]
  %v197 = vld [vmem:[%s4 + $0x8] sm:$0xf]
  %v198 = vld [vmem:[%s4 + $0xc] sm:$0xf]
  %v199 = vpack.c.bf16 %v186, %v185
  %v200 = vperm.slane %v187, 0
  %v205 = vunpack.c.l.b16 %v195
  %v206 = vunpack.c.l.b16 %v196
  %v207 = vunpack.c.l.b16 %v197
  %v208 = vunpack.c.l.b16 %v198
  %v209 = vpack.c.b16 %v206, %v205
  %v210 = vpack.c.b16 %v208, %v207
  %v214 = vsel %vm125, %v199, 0
  %216 = vmatpush.bf16.msra.mxu0 0
  %217 = vmatpush.bf16.msra.mxu0 0
  %218 = vmatpush.bf16.msra.mxu0 0
  %219 = vmatpush.bf16.msra.mxu0 0
  %220 = vmatpush.bf16.msra.mxu0 0
  %221 = vmatpush.bf16.msra.mxu0 0
  %222 = vmatpush.bf16.msra.mxu0 %v210
  %223 = vmatpush.bf16.msra.mxu0 %v209
  %224 = vmatmul.bf16.gmra.mxu0 %v214
  %v225 = vpop.f32.mrf.mxu0
  %v226 = vadd.f32 %v200, %v225
  %v227 = vpop.f32.mrf.mxu0
  %v228 = vadd.f32 %v200, %v227
  %229 = vdwg.mxu0
  %231 = vrot.lane.b32.xlu0 %v226, 112
  %v232 = vpop.permute.xlu0 %231
  %235 = vrot.lane.b32.xlu0 %v228, 112
  %v236 = vpop.permute.xlu0 %235
  %v238 = vpack.c.bf16 %v226, %v226
  %v239 = vpack.c.bf16 %v232, %v232
  %v240 = vpack.c.bf16 %v228, %v228
  %v241 = vpack.c.bf16 %v236, %v236
  %v243 = vunpack.c.l.b16 %v238
  %v244 = vpack.c.b16 %v243, %v243
  %245 = vrot.lane.b32.xlu0 %v244, 96
  %v246 = vpop.permute.xlu0 %245
  %vm247 = vcmask 130048
  %v249 = vsel %vm247, %v238, 0
  %v252 = vsel %vm247, %v246, 0
  %254 = vmatpush.bf16.xpose.msra.mxu0 0
  %255 = vmatpush.bf16.xpose.msra.mxu0 0
  %256 = vmatpush.bf16.xpose.msra.mxu0 0
  %257 = vmatpush.bf16.xpose.msra.mxu0 0
  %258 = vmatpush.bf16.xpose.msra.mxu0 0
  %259 = vmatpush.bf16.xpose.msra.mxu0 0
  %260 = vmatpush.bf16.xpose.msra.mxu0 0
  %261 = vmatpush.bf16.xpose.msra.mxu0 %v252
  %262 = vmatmul.bf16.gmra.mxu0 %v249
  %v263 = vpop.f32.mrf.mxu0
  %v264 = vadd.f32 0.0, %v263
  %v265 = vpop.f32.mrf.mxu0
  %266 = vdwg.mxu0
  %v268 = vunpack.c.l.b16 %v239
  %v269 = vpack.c.b16 %v268, %v268
  %270 = vrot.lane.b32.xlu0 %v269, 96
  %v271 = vpop.permute.xlu0 %270
  %v273 = vsel %vm247, %v239, 0
  %v276 = vsel %vm247, %v271, 0
  %278 = vmatpush.bf16.xpose.msra.mxu0 0
  %279 = vmatpush.bf16.xpose.msra.mxu0 0
  %280 = vmatpush.bf16.xpose.msra.mxu0 0
  %281 = vmatpush.bf16.xpose.msra.mxu0 0
  %282 = vmatpush.bf16.xpose.msra.mxu0 0
  %283 = vmatpush.bf16.xpose.msra.mxu0 0
  %284 = vmatpush.bf16.xpose.msra.mxu0 0
  %285 = vmatpush.bf16.xpose.msra.mxu0 %v276
  %286 = vmatmul.bf16.gmra.mxu0 %v273
  %v287 = vpop.f32.mrf.mxu0
  %v288 = vadd.f32 0.0, %v287
  %v289 = vpop.f32.mrf.mxu0
  %290 = vdwg.mxu0
  %v292 = vunpack.c.l.b16 %v240
  %v293 = vpack.c.b16 %v292, %v292
  %294 = vrot.lane.b32.xlu0 %v293, 96
  %v295 = vpop.permute.xlu0 %294
  %v297 = vsel %vm247, %v240, 0
  %v300 = vsel %vm247, %v295, 0
  %302 = vmatpush.bf16.xpose.msra.mxu0 0
  %303 = vmatpush.bf16.xpose.msra.mxu0 0
  %304 = vmatpush.bf16.xpose.msra.mxu0 0
  %305 = vmatpush.bf16.xpose.msra.mxu0 0
  %306 = vmatpush.bf16.xpose.msra.mxu0 0
  %307 = vmatpush.bf16.xpose.msra.mxu0 0
  %308 = vmatpush.bf16.xpose.msra.mxu0 0
  %309 = vmatpush.bf16.xpose.msra.mxu0 %v300
  %310 = vmatmul.bf16.gmra.mxu0 %v297
  %v311 = vpop.f32.mrf.mxu0
  %v312 = vadd.f32 0.0, %v311
  %v313 = vpop.f32.mrf.mxu0
  %314 = vdwg.mxu0
  %v316 = vunpack.c.l.b16 %v241
  %v317 = vpack.c.b16 %v316, %v316
  %318 = vrot.lane.b32.xlu0 %v317, 96
  %v319 = vpop.permute.xlu0 %318
  %v321 = vsel %vm247, %v241, 0
  %v324 = vsel %vm247, %v319, 0
  %326 = vmatpush.bf16.xpose.msra.mxu0 0
  %327 = vmatpush.bf16.xpose.msra.mxu0 0
  %328 = vmatpush.bf16.xpose.msra.mxu0 0
  %329 = vmatpush.bf16.xpose.msra.mxu0 0
  %330 = vmatpush.bf16.xpose.msra.mxu0 0
  %331 = vmatpush.bf16.xpose.msra.mxu0 0
  %332 = vmatpush.bf16.xpose.msra.mxu0 0
  %333 = vmatpush.bf16.xpose.msra.mxu0 %v324
  %334 = vmatmul.bf16.gmra.mxu0 %v321
  %v335 = vpop.f32.mrf.mxu0
  %v336 = vadd.f32 0.0, %v335
  %v337 = vpop.f32.mrf.mxu0
  %338 = vdwg.mxu0
  %v339 = vmul.f32 %v264, 0.25
  %v340 = vmul.f32 %v288, 0.25
  %v341 = vmul.f32 %v312, 0.25
  %v342 = vmul.f32 %v336, 0.25
  %v343 = vperm.slane %v119, 0
  %v344 = vperm.slane %v121, 0
  %v345 = vadd.f32 %v339, %v343
  %v346 = vadd.f32 %v340, %v343
  %v347 = vadd.f32 %v341, %v344
  %v348 = vadd.f32 %v342, %v344
  %vm349 = vcmask 64512
  %v350 = vsel %vm349, %v345, -inf
  %351 = vmax.xlane.f32.xlu0 %v350
  %v352 = vpop.xlane.xlu0 %351
  %v353 = vsel %vm349, %v346, -inf
  %354 = vmax.xlane.f32.xlu0 %v353
  %v355 = vpop.xlane.xlu0 %354
  %v356 = vsel %vm349, %v347, -inf
  %357 = vmax.xlane.f32.xlu0 %v356
  %v358 = vpop.xlane.xlu0 %357
  %v359 = vsel %vm349, %v348, -inf
  %360 = vmax.xlane.f32.xlu0 %v359
  %v361 = vpop.xlane.xlu0 %360
  %v362 = vsub.f32 %v345, %v352
  %v363 = vsub.f32 %v346, %v355
  %v364 = vsub.f32 %v347, %v358
  %v365 = vsub.f32 %v348, %v361
  %v366 = vmul.f32 %v362, 1.442695
  %v367 = vpow.pop %v366
  %v368 = vmul.f32 %v363, 1.442695
  %v369 = vpow.pop %v368
  %v370 = vmul.f32 %v364, 1.442695
  %v371 = vpow.pop %v370
  %v372 = vmul.f32 %v365, 1.442695
  %v373 = vpow.pop %v372
  %v374 = vsel %vm349, %v367, 0.0
  %375 = vadd.xlane.f32.xlu0 %v374
  %v376 = vpop.xlane.xlu0 %375
  %v377 = vsel %vm349, %v369, 0.0
  %378 = vadd.xlane.f32.xlu0 %v377
  %v379 = vpop.xlane.xlu0 %378
  %v380 = vsel %vm349, %v371, 0.0
  %381 = vadd.xlane.f32.xlu0 %v380
  %v382 = vpop.xlane.xlu0 %381
  %v383 = vsel %vm349, %v373, 0.0
  %384 = vadd.xlane.f32.xlu0 %v383
  %v385 = vpop.xlane.xlu0 %384
  %v386 = vrcp.pop %v376
  %v387 = vrcp.pop %v379
  %v388 = vrcp.pop %v382
  %v389 = vrcp.pop %v385
  %v390 = vmul.f32 %v367, %v386
  %v391 = vmul.f32 %v369, %v387
  %v392 = vmul.f32 %v371, %v388
  %v393 = vmul.f32 %v373, %v389
  %v394 = vpack.c.bf16 %v390, %v390
  %v395 = vpack.c.bf16 %v391, %v391
  %v396 = vpack.c.bf16 %v392, %v392
  %v397 = vpack.c.bf16 %v393, %v393
  %398 = vrot.lane.b32.xlu0 %v244, 64
  %v399 = vpop.permute.xlu0 %398
  %v401 = vsel %vm349, %v394, 0
  %v404 = vsel %vm88, %v399, 0
  %406 = vmatpush.bf16.msra.mxu0 0
  %407 = vmatpush.bf16.msra.mxu0 0
  %408 = vmatpush.bf16.msra.mxu0 0
  %409 = vmatpush.bf16.msra.mxu0 0
  %410 = vmatpush.bf16.msra.mxu0 0
  %411 = vmatpush.bf16.msra.mxu0 0
  %412 = vmatpush.bf16.msra.mxu0 0
  %413 = vmatpush.bf16.msra.mxu0 %v404
  %414 = vmatmul.bf16.gmra.mxu0 %v401
  %v415 = vpop.f32.mrf.mxu0
  %v416 = vadd.f32 0.0, %v415
  %v417 = vpop.f32.mrf.mxu0
  %418 = vdwg.mxu0
  %419 = vrot.lane.b32.xlu0 %v269, 64
  %v420 = vpop.permute.xlu0 %419
  %v422 = vsel %vm349, %v395, 0
  %v425 = vsel %vm88, %v420, 0
  %427 = vmatpush.bf16.msra.mxu0 0
  %428 = vmatpush.bf16.msra.mxu0 0
  %429 = vmatpush.bf16.msra.mxu0 0
  %430 = vmatpush.bf16.msra.mxu0 0
  %431 = vmatpush.bf16.msra.mxu0 0
  %432 = vmatpush.bf16.msra.mxu0 0
  %433 = vmatpush.bf16.msra.mxu0 0
  %434 = vmatpush.bf16.msra.mxu0 %v425
  %435 = vmatmul.bf16.gmra.mxu0 %v422
  %v436 = vpop.f32.mrf.mxu0
  %v437 = vadd.f32 0.0, %v436
  %v438 = vpop.f32.mrf.mxu0
  %439 = vdwg.mxu0
  %440 = vrot.lane.b32.xlu0 %v293, 64
  %v441 = vpop.permute.xlu0 %440
  %v443 = vsel %vm349, %v396, 0
  %v446 = vsel %vm88, %v441, 0
  %448 = vmatpush.bf16.msra.mxu0 0
  %449 = vmatpush.bf16.msra.mxu0 0
  %450 = vmatpush.bf16.msra.mxu0 0
  %451 = vmatpush.bf16.msra.mxu0 0
  %452 = vmatpush.bf16.msra.mxu0 0
  %453 = vmatpush.bf16.msra.mxu0 0
  %454 = vmatpush.bf16.msra.mxu0 0
  %455 = vmatpush.bf16.msra.mxu0 %v446
  %456 = vmatmul.bf16.gmra.mxu0 %v443
  %v457 = vpop.f32.mrf.mxu0
  %v458 = vadd.f32 0.0, %v457
  %v459 = vpop.f32.mrf.mxu0
  %460 = vdwg.mxu0
  %461 = vrot.lane.b32.xlu0 %v317, 64
  %v462 = vpop.permute.xlu0 %461
  %v464 = vsel %vm349, %v397, 0
  %v467 = vsel %vm88, %v462, 0
  %469 = vmatpush.bf16.msra.mxu0 0
  %470 = vmatpush.bf16.msra.mxu0 0
  %471 = vmatpush.bf16.msra.mxu0 0
  %472 = vmatpush.bf16.msra.mxu0 0
  %473 = vmatpush.bf16.msra.mxu0 0
  %474 = vmatpush.bf16.msra.mxu0 0
  %475 = vmatpush.bf16.msra.mxu0 0
  %476 = vmatpush.bf16.msra.mxu0 %v467
  %477 = vmatmul.bf16.gmra.mxu0 %v464
  %v478 = vpop.f32.mrf.mxu0
  %v479 = vadd.f32 0.0, %v478
  %v480 = vpop.f32.mrf.mxu0
  %481 = vdwg.mxu0
  %483 = vrot.lane.b32.xlu0 %v437, 16
  %v484 = vpop.permute.xlu0 %483
  %v486 = vsel %vm247, %v416, %v484
  %488 = vrot.lane.b32.xlu0 %v479, 16
  %v489 = vpop.permute.xlu0 %488
  %v491 = vsel %vm247, %v458, %v489
  %v492 = vld [vmem:[%s5] sm:$0xf]
  %v493 = vld [vmem:[%s5 + $0x4] sm:$0xf]
  %v494 = vld [vmem:[%s5 + $0x8] sm:$0xf]
  %v495 = vld [vmem:[%s5 + $0xc] sm:$0xf]
  %v496 = vpack.c.bf16 %v491, %v486
  %v497 = vperm.slane %v188, 0
  %v502 = vunpack.c.l.b16 %v492
  %v503 = vunpack.c.l.b16 %v493
  %v504 = vunpack.c.l.b16 %v494
  %v505 = vunpack.c.l.b16 %v495
  %v506 = vpack.c.b16 %v503, %v502
  %v507 = vpack.c.b16 %v505, %v504
  %v511 = vsel %vm125, %v496, 0
  %513 = vmatpush.bf16.msra.mxu0 0
  %514 = vmatpush.bf16.msra.mxu0 0
  %515 = vmatpush.bf16.msra.mxu0 0
  %516 = vmatpush.bf16.msra.mxu0 0
  %517 = vmatpush.bf16.msra.mxu0 0
  %518 = vmatpush.bf16.msra.mxu0 0
  %519 = vmatpush.bf16.msra.mxu0 %v507
  %520 = vmatpush.bf16.msra.mxu0 %v506
  %521 = vmatmul.bf16.gmra.mxu0 %v511
  %v522 = vpop.f32.mrf.mxu0
  %v523 = vadd.f32 %v497, %v522
  %v524 = vpop.f32.mrf.mxu0
  %v525 = vadd.f32 %v497, %v524
  %526 = vdwg.mxu0
  %v527 = vadd.f32 %v523, %v185
  %v528 = vadd.f32 %v525, %v186
  %v529 = vsel %vm125, %v527, 0.0
  %530 = vadd.xlane.f32.xlu0 %v529
  %v531 = vpop.xlane.xlu0 %530
  %v532 = vsel %vm125, %v528, 0.0
  %533 = vadd.xlane.f32.xlu0 %v532
  %v534 = vpop.xlane.xlu0 %533
  %v535 = vmul.f32 %v531, %v138
  %v536 = vmul.f32 %v534, %v138
  %v537 = vmul.f32 %v527, %v527
  %v538 = vmul.f32 %v528, %v528
  %v539 = vsel %vm125, %v537, 0.0
  %540 = vadd.xlane.f32.xlu0 %v539
  %v541 = vpop.xlane.xlu0 %540
  %v542 = vsel %vm125, %v538, 0.0
  %543 = vadd.xlane.f32.xlu0 %v542
  %v544 = vpop.xlane.xlu0 %543
  %v545 = vmul.f32 %v541, %v138
  %v546 = vmul.f32 %v544, %v138
  %v547 = vmul.f32 %v535, %v535
  %v548 = vmul.f32 %v536, %v536
  %v549 = vsub.f32 %v545, %v547
  %v550 = vsub.f32 %v546, %v548
  %v551 = vsub.f32 %v527, %v535
  %v552 = vsub.f32 %v528, %v536
  %v553 = vadd.f32 %v549, 1e-12
  %v554 = vadd.f32 %v550, 1e-12
  %v555 = vrsqrt.pop %v553
  %v556 = vmul.f32 %v555, %v553
  %v557 = vmul.f32 %v556, %v555
  %v558 = vmul.f32 0.5, %v557
  %v559 = vsub.f32 1.5, %v558
  %v560 = vmul.f32 %v555, %v559
  %vm561 = vweird.f32 %v553
  %vm562 = vweird.f32 %v555
  %vm563 = vmor %vm561, %vm562
  %v564 = vsel %vm563, %v555, %v560
  %v565 = vrsqrt.pop %v554
  %v566 = vmul.f32 %v565, %v554
  %v567 = vmul.f32 %v566, %v565
  %v568 = vmul.f32 0.5, %v567
  %v569 = vsub.f32 1.5, %v568
  %v570 = vmul.f32 %v565, %v569
  %vm571 = vweird.f32 %v554
  %vm572 = vweird.f32 %v565
  %vm573 = vmor %vm571, %vm572
  %v574 = vsel %vm573, %v565, %v570
  %v575 = vmul.f32 %v551, %v564
  %v576 = vmul.f32 %v552, %v574
  %v577 = vperm.slane %v189, 0
  %v578 = vmul.f32 %v575, %v577
  %v579 = vmul.f32 %v576, %v577
  %v580 = vperm.slane %v190, 0
  %v581 = vadd.f32 %v578, %v580
  %v582 = vadd.f32 %v579, %v580
  %v583 = vld [vmem:[%s6] sm:$0xf]
  %v584 = vld [vmem:[%s6 + $0x4] sm:$0xf]
  %v585 = vld [vmem:[%s6 + $0x8] sm:$0xf]
  %v586 = vld [vmem:[%s6 + $0xc] sm:$0xf]
  %v587 = vpack.c.bf16 %v582, %v581
  %v588 = vperm.slane %v191, 0
  %v593 = vunpack.c.l.b16 %v583
  %v594 = vunpack.c.l.b16 %v584
  %v595 = vunpack.c.l.b16 %v585
  %v596 = vunpack.c.l.b16 %v586
  %v597 = vpack.c.b16 %v594, %v593
  %v598 = vpack.c.b16 %v596, %v595
  %v602 = vsel %vm125, %v587, 0
  %604 = vmatpush.bf16.msra.mxu0 0
  %605 = vmatpush.bf16.msra.mxu0 0
  %606 = vmatpush.bf16.msra.mxu0 0
  %607 = vmatpush.bf16.msra.mxu0 0
  %608 = vmatpush.bf16.msra.mxu0 0
  %609 = vmatpush.bf16.msra.mxu0 0
  %610 = vmatpush.bf16.msra.mxu0 %v598
  %611 = vmatpush.bf16.msra.mxu0 %v597
  %612 = vmatmul.bf16.gmra.mxu0 %v602
  %v613 = vpop.f32.mrf.mxu0
  %v614 = vadd.f32 %v588, %v613
  %v615 = vpop.f32.mrf.mxu0
  %v616 = vadd.f32 %v588, %v615
  %617 = vdwg.mxu0
  %v618 = vmul.f32 %v614, 0.5
  %v619 = vmul.f32 %v616, 0.5
  %v620 = vmul.f32 %v614, 0.044715
  %v621 = vmul.f32 %v616, 0.044715
  %v622 = vmul.f32 %v620, %v614
  %v623 = vmul.f32 %v621, %v616
  %v624 = vmul.f32 %v622, %v614
  %v625 = vmul.f32 %v623, %v616
  %v626 = vadd.f32 %v614, %v624
  %v627 = vadd.f32 %v616, %v625
  %v628 = vmul.f32 %v626, 0.7978846
  %v629 = vmul.f32 %v627, 0.7978846
  %v630 = vtanh.pop %v628
  %v631 = vtanh.pop %v629
  %v632 = vadd.f32 %v630, 1.0
  %v633 = vadd.f32 %v631, 1.0
  %v634 = vmul.f32 %v618, %v632
  %v635 = vmul.f32 %v619, %v633
  %v636 = vld [vmem:[%s7] sm:$0xf]
  %v637 = vld [vmem:[%s7 + $0x4] sm:$0xf]
  %v638 = vld [vmem:[%s7 + $0x8] sm:$0xf]
  %v639 = vld [vmem:[%s7 + $0xc] sm:$0xf]
  %v640 = vld [vmem:[%s7 + $0x10] sm:$0xf]
  %v641 = vld [vmem:[%s7 + $0x14] sm:$0xf]
  %v642 = vld [vmem:[%s7 + $0x18] sm:$0xf]
  %v643 = vld [vmem:[%s7 + $0x1c] sm:$0xf]
  %v644 = vpack.c.bf16 %v635, %v634
  %v645 = vperm.slane %v192, 0
  %v654 = vunpack.c.l.b16 %v636
  %v655 = vunpack.c.l.b16 %v637
  %v656 = vunpack.c.l.b16 %v638
  %v657 = vunpack.c.l.b16 %v639
  %v658 = vunpack.c.l.b16 %v640
  %v659 = vunpack.c.l.b16 %v641
  %v660 = vunpack.c.l.b16 %v642
  %v661 = vunpack.c.l.b16 %v643
  %v662 = vpack.c.b16 %v655, %v654
  %v663 = vpack.c.b16 %v657, %v656
  %v664 = vpack.c.b16 %v659, %v658
  %v665 = vpack.c.b16 %v661, %v660
  %vm670 = vcmask 523264
  %v672 = vsel %vm670, %v644, 0
  %674 = vmatpush.bf16.msra.mxu0 0
  %675 = vmatpush.bf16.msra.mxu0 0
  %676 = vmatpush.bf16.msra.mxu0 0
  %677 = vmatpush.bf16.msra.mxu0 0
  %678 = vmatpush.bf16.msra.mxu0 %v665
  %679 = vmatpush.bf16.msra.mxu0 %v664
  %680 = vmatpush.bf16.msra.mxu0 %v663
  %681 = vmatpush.bf16.msra.mxu0 %v662
  %682 = vmatmul.bf16.gmra.mxu0 %v672
  %v683 = vpop.f32.mrf.mxu0
  %v684 = vadd.f32 %v645, %v683
  %v685 = vpop.f32.mrf.mxu0
  %v686 = vadd.f32 %v645, %v685
  %687 = vdwg.mxu0
  %v688 = vadd.f32 %v684, %v581
  %v689 = vadd.f32 %v686, %v582
  %v690 = vsel %vm125, %v688, 0.0
  %691 = vadd.xlane.f32.xlu0 %v690
  %v692 = vpop.xlane.xlu0 %691
  %v693 = vsel %vm125, %v689, 0.0
  %694 = vadd.xlane.f32.xlu0 %v693
  %v695 = vpop.xlane.xlu0 %694
  %v696 = vmul.f32 %v692, %v138
  %v697 = vmul.f32 %v695, %v138
  %v698 = vmul.f32 %v688, %v688
  %v699 = vmul.f32 %v689, %v689
  %v700 = vsel %vm125, %v698, 0.0
  %701 = vadd.xlane.f32.xlu0 %v700
  %v702 = vpop.xlane.xlu0 %701
  %v703 = vsel %vm125, %v699, 0.0
  %704 = vadd.xlane.f32.xlu0 %v703
  %v705 = vpop.xlane.xlu0 %704
  %v706 = vmul.f32 %v702, %v138
  %v707 = vmul.f32 %v705, %v138
  %v708 = vmul.f32 %v696, %v696
  %v709 = vmul.f32 %v697, %v697
  %v710 = vsub.f32 %v706, %v708
  %v711 = vsub.f32 %v707, %v709
  %v712 = vsub.f32 %v688, %v696
  %v713 = vsub.f32 %v689, %v697
  %v714 = vadd.f32 %v710, 1e-12
  %v715 = vadd.f32 %v711, 1e-12
  %v716 = vrsqrt.pop %v714
  %v717 = vmul.f32 %v716, %v714
  %v718 = vmul.f32 %v717, %v716
  %v719 = vmul.f32 0.5, %v718
  %v720 = vsub.f32 1.5, %v719
  %v721 = vmul.f32 %v716, %v720
  %vm722 = vweird.f32 %v714
  %vm723 = vweird.f32 %v716
  %vm724 = vmor %vm722, %vm723
  %v725 = vsel %vm724, %v716, %v721
  %v726 = vrsqrt.pop %v715
  %v727 = vmul.f32 %v726, %v715
  %v728 = vmul.f32 %v727, %v726
  %v729 = vmul.f32 0.5, %v728
  %v730 = vsub.f32 1.5, %v729
  %v731 = vmul.f32 %v726, %v730
  %vm732 = vweird.f32 %v715
  %vm733 = vweird.f32 %v726
  %vm734 = vmor %vm732, %vm733
  %v735 = vsel %vm734, %v726, %v731
  %v736 = vmul.f32 %v712, %v725
  %v737 = vmul.f32 %v713, %v735
  %v738 = vperm.slane %v193, 0
  %v739 = vmul.f32 %v736, %v738
  %v740 = vmul.f32 %v737, %v738
  %v741 = vperm.slane %v194, 0
  %v742 = vadd.f32 %v739, %v741
  %v743 = vadd.f32 %v740, %v741
  %v744 = vld [vmem:[%s3 + $0xb] sm:$0x1]
  %v745 = vld [vmem:[%s3 + $0xc] sm:$0x1]
  %v746 = vld [vmem:[%s3 + $0xd] sm:$0x1]
  %v747 = vld [vmem:[%s3 + $0xe] sm:$0x1]
  %v748 = vld [vmem:[%s3 + $0xf] sm:$0x1]
  %v749 = vld [vmem:[%s3 + $0x10] sm:$0x1]
  %v750 = vld [vmem:[%s3 + $0x11] sm:$0x1]
  %v751 = vld [vmem:[%s3 + $0x12] sm:$0x1]
  %s752 = scalar_lea.vmem %s4, 16
  %v753 = vld [vmem:[%s752] sm:$0xf]
  %v754 = vld [vmem:[%s752 + $0x4] sm:$0xf]
  %v755 = vld [vmem:[%s752 + $0x8] sm:$0xf]
  %v756 = vld [vmem:[%s752 + $0xc] sm:$0xf]
  %v757 = vpack.c.bf16 %v743, %v742
  %v758 = vperm.slane %v744, 0
  %v763 = vunpack.c.l.b16 %v753
  %v764 = vunpack.c.l.b16 %v754
  %v765 = vunpack.c.l.b16 %v755
  %v766 = vunpack.c.l.b16 %v756
  %v767 = vpack.c.b16 %v764, %v763
  %v768 = vpack.c.b16 %v766, %v765
  %v772 = vsel %vm125, %v757, 0
  %774 = vmatpush.bf16.msra.mxu0 0
  %775 = vmatpush.bf16.msra.mxu0 0
  %776 = vmatpush.bf16.msra.mxu0 0
  %777 = vmatpush.bf16.msra.mxu0 0
  %778 = vmatpush.bf16.msra.mxu0 0
  %779 = vmatpush.bf16.msra.mxu0 0
  %780 = vmatpush.bf16.msra.mxu0 %v768
  %781 = vmatpush.bf16.msra.mxu0 %v767
  %782 = vmatmul.bf16.gmra.mxu0 %v772
  %v783 = vpop.f32.mrf.mxu0
  %v784 = vadd.f32 %v758, %v783
  %v785 = vpop.f32.mrf.mxu0
  %v786 = vadd.f32 %v758, %v785
  %787 = vdwg.mxu0
  %789 = vrot.lane.b32.xlu0 %v784, 112
  %v790 = vpop.permute.xlu0 %789
  %793 = vrot.lane.b32.xlu0 %v786, 112
  %v794 = vpop.permute.xlu0 %793
  %v796 = vpack.c.bf16 %v784, %v784
  %v797 = vpack.c.bf16 %v790, %v790
  %v798 = vpack.c.bf16 %v786, %v786
  %v799 = vpack.c.bf16 %v794, %v794
  %v801 = vunpack.c.l.b16 %v796
  %v802 = vpack.c.b16 %v801, %v801
  %803 = vrot.lane.b32.xlu0 %v802, 96
  %v804 = vpop.permute.xlu0 %803
  %v806 = vsel %vm247, %v796, 0
  %v809 = vsel %vm247, %v804, 0
  %811 = vmatpush.bf16.xpose.msra.mxu0 0
  %812 = vmatpush.bf16.xpose.msra.mxu0 0
  %813 = vmatpush.bf16.xpose.msra.mxu0 0
  %814 = vmatpush.bf16.xpose.msra.mxu0 0
  %815 = vmatpush.bf16.xpose.msra.mxu0 0
  %816 = vmatpush.bf16.xpose.msra.mxu0 0
  %817 = vmatpush.bf16.xpose.msra.mxu0 0
  %818 = vmatpush.bf16.xpose.msra.mxu0 %v809
  %819 = vmatmul.bf16.gmra.mxu0 %v806
  %v820 = vpop.f32.mrf.mxu0
  %v821 = vadd.f32 0.0, %v820
  %v822 = vpop.f32.mrf.mxu0
  %823 = vdwg.mxu0
  %v825 = vunpack.c.l.b16 %v797
  %v826 = vpack.c.b16 %v825, %v825
  %827 = vrot.lane.b32.xlu0 %v826, 96
  %v828 = vpop.permute.xlu0 %827
  %v830 = vsel %vm247, %v797, 0
  %v833 = vsel %vm247, %v828, 0
  %835 = vmatpush.bf16.xpose.msra.mxu0 0
  %836 = vmatpush.bf16.xpose.msra.mxu0 0
  %837 = vmatpush.bf16.xpose.msra.mxu0 0
  %838 = vmatpush.bf16.xpose.msra.mxu0 0
  %839 = vmatpush.bf16.xpose.msra.mxu0 0
  %840 = vmatpush.bf16.xpose.msra.mxu0 0
  %841 = vmatpush.bf16.xpose.msra.mxu0 0
  %842 = vmatpush.bf16.xpose.msra.mxu0 %v833
  %843 = vmatmul.bf16.gmra.mxu0 %v830
  %v844 = vpop.f32.mrf.mxu0
  %v845 = vadd.f32 0.0, %v844
  %v846 = vpop.f32.mrf.mxu0
  %847 = vdwg.mxu0
  %v849 = vunpack.c.l.b16 %v798
  %v850 = vpack.c.b16 %v849, %v849
  %851 = vrot.lane.b32.xlu0 %v850, 96
  %v852 = vpop.permute.xlu0 %851
  %v854 = vsel %vm247, %v798, 0
  %v857 = vsel %vm247, %v852, 0
  %859 = vmatpush.bf16.xpose.msra.mxu0 0
  %860 = vmatpush.bf16.xpose.msra.mxu0 0
  %861 = vmatpush.bf16.xpose.msra.mxu0 0
  %862 = vmatpush.bf16.xpose.msra.mxu0 0
  %863 = vmatpush.bf16.xpose.msra.mxu0 0
  %864 = vmatpush.bf16.xpose.msra.mxu0 0
  %865 = vmatpush.bf16.xpose.msra.mxu0 0
  %866 = vmatpush.bf16.xpose.msra.mxu0 %v857
  %867 = vmatmul.bf16.gmra.mxu0 %v854
  %v868 = vpop.f32.mrf.mxu0
  %v869 = vadd.f32 0.0, %v868
  %v870 = vpop.f32.mrf.mxu0
  %871 = vdwg.mxu0
  %v873 = vunpack.c.l.b16 %v799
  %v874 = vpack.c.b16 %v873, %v873
  %875 = vrot.lane.b32.xlu0 %v874, 96
  %v876 = vpop.permute.xlu0 %875
  %v878 = vsel %vm247, %v799, 0
  %v881 = vsel %vm247, %v876, 0
  %883 = vmatpush.bf16.xpose.msra.mxu0 0
  %884 = vmatpush.bf16.xpose.msra.mxu0 0
  %885 = vmatpush.bf16.xpose.msra.mxu0 0
  %886 = vmatpush.bf16.xpose.msra.mxu0 0
  %887 = vmatpush.bf16.xpose.msra.mxu0 0
  %888 = vmatpush.bf16.xpose.msra.mxu0 0
  %889 = vmatpush.bf16.xpose.msra.mxu0 0
  %890 = vmatpush.bf16.xpose.msra.mxu0 %v881
  %891 = vmatmul.bf16.gmra.mxu0 %v878
  %v892 = vpop.f32.mrf.mxu0
  %v893 = vadd.f32 0.0, %v892
  %v894 = vpop.f32.mrf.mxu0
  %895 = vdwg.mxu0
  %v896 = vmul.f32 %v821, 0.25
  %v897 = vmul.f32 %v845, 0.25
  %v898 = vmul.f32 %v869, 0.25
  %v899 = vmul.f32 %v893, 0.25
  %v900 = vadd.f32 %v896, %v343
  %v901 = vadd.f32 %v897, %v343
  %v902 = vadd.f32 %v898, %v344
  %v903 = vadd.f32 %v899, %v344
  %v904 = vsel %vm349, %v900, -inf
  %905 = vmax.xlane.f32.xlu0 %v904
  %v906 = vpop.xlane.xlu0 %905
  %v907 = vsel %vm349, %v901, -inf
  %908 = vmax.xlane.f32.xlu0 %v907
  %v909 = vpop.xlane.xlu0 %908
  %v910 = vsel %vm349, %v902, -inf
  %911 = vmax.xlane.f32.xlu0 %v910
  %v912 = vpop.xlane.xlu0 %911
  %v913 = vsel %vm349, %v903, -inf
  %914 = vmax.xlane.f32.xlu0 %v913
  %v915 = vpop.xlane.xlu0 %914
  %v916 = vsub.f32 %v900, %v906
  %v917 = vsub.f32 %v901, %v909
  %v918 = vsub.f32 %v902, %v912
  %v919 = vsub.f32 %v903, %v915
  %v920 = vmul.f32 %v916, 1.442695
  %v921 = vpow.pop %v920
  %v922 = vmul.f32 %v917, 1.442695
  %v923 = vpow.pop %v922
  %v924 = vmul.f32 %v918, 1.442695
  %v925 = vpow.pop %v924
  %v926 = vmul.f32 %v919, 1.442695
  %v927 = vpow.pop %v926
  %v928 = vsel %vm349, %v921, 0.0
  %929 = vadd.xlane.f32.xlu0 %v928
  %v930 = vpop.xlane.xlu0 %929
  %v931 = vsel %vm349, %v923, 0.0
  %932 = vadd.xlane.f32.xlu0 %v931
  %v933 = vpop.xlane.xlu0 %932
  %v934 = vsel %vm349, %v925, 0.0
  %935 = vadd.xlane.f32.xlu0 %v934
  %v936 = vpop.xlane.xlu0 %935
  %v937 = vsel %vm349, %v927, 0.0
  %938 = vadd.xlane.f32.xlu0 %v937
  %v939 = vpop.xlane.xlu0 %938
  %v940 = vrcp.pop %v930
  %v941 = vrcp.pop %v933
  %v942 = vrcp.pop %v936
  %v943 = vrcp.pop %v939
  %v944 = vmul.f32 %v921, %v940
  %v945 = vmul.f32 %v923, %v941
  %v946 = vmul.f32 %v925, %v942
  %v947 = vmul.f32 %v927, %v943
  %v948 = vpack.c.bf16 %v944, %v944
  %v949 = vpack.c.bf16 %v945, %v945
  %v950 = vpack.c.bf16 %v946, %v946
  %v951 = vpack.c.bf16 %v947, %v947
  %952 = vrot.lane.b32.xlu0 %v802, 64
  %v953 = vpop.permute.xlu0 %952
  %v955 = vsel %vm349, %v948, 0
  %v958 = vsel %vm88, %v953, 0
  %960 = vmatpush.bf16.msra.mxu0 0
  %961 = vmatpush.bf16.msra.mxu0 0
  %962 = vmatpush.bf16.msra.mxu0 0
  %963 = vmatpush.bf16.msra.mxu0 0
  %964 = vmatpush.bf16.msra.mxu0 0
  %965 = vmatpush.bf16.msra.mxu0 0
  %966 = vmatpush.bf16.msra.mxu0 0
  %967 = vmatpush.bf16.msra.mxu0 %v958
  %968 = vmatmul.bf16.gmra.mxu0 %v955
  %v969 = vpop.f32.mrf.mxu0
  %v970 = vadd.f32 0.0, %v969
  %v971 = vpop.f32.mrf.mxu0
  %972 = vdwg.mxu0
  %973 = vrot.lane.b32.xlu0 %v826, 64
  %v974 = vpop.permute.xlu0 %973
  %v976 = vsel %vm349, %v949, 0
  %v979 = vsel %vm88, %v974, 0
  %981 = vmatpush.bf16.msra.mxu0 0
  %982 = vmatpush.bf16.msra.mxu0 0
  %983 = vmatpush.bf16.msra.mxu0 0
  %984 = vmatpush.bf16.msra.mxu0 0
  %985 = vmatpush.bf16.msra.mxu0 0
  %986 = vmatpush.bf16.msra.mxu0 0
  %987 = vmatpush.bf16.msra.mxu0 0
  %988 = vmatpush.bf16.msra.mxu0 %v979
  %989 = vmatmul.bf16.gmra.mxu0 %v976
  %v990 = vpop.f32.mrf.mxu0
  %v991 = vadd.f32 0.0, %v990
  %v992 = vpop.f32.mrf.mxu0
  %993 = vdwg.mxu0
  %994 = vrot.lane.b32.xlu0 %v850, 64
  %v995 = vpop.permute.xlu0 %994
  %v997 = vsel %vm349, %v950, 0
  %v1000 = vsel %vm88, %v995, 0
  %1002 = vmatpush.bf16.msra.mxu0 0
  %1003 = vmatpush.bf16.msra.mxu0 0
  %1004 = vmatpush.bf16.msra.mxu0 0
  %1005 = vmatpush.bf16.msra.mxu0 0
  %1006 = vmatpush.bf16.msra.mxu0 0
  %1007 = vmatpush.bf16.msra.mxu0 0
  %1008 = vmatpush.bf16.msra.mxu0 0
  %1009 = vmatpush.bf16.msra.mxu0 %v1000
  %1010 = vmatmul.bf16.gmra.mxu0 %v997
  %v1011 = vpop.f32.mrf.mxu0
  %v1012 = vadd.f32 0.0, %v1011
  %v1013 = vpop.f32.mrf.mxu0
  %1014 = vdwg.mxu0
  %1015 = vrot.lane.b32.xlu0 %v874, 64
  %v1016 = vpop.permute.xlu0 %1015
  %v1018 = vsel %vm349, %v951, 0
  %v1021 = vsel %vm88, %v1016, 0
  %1023 = vmatpush.bf16.msra.mxu0 0
  %1024 = vmatpush.bf16.msra.mxu0 0
  %1025 = vmatpush.bf16.msra.mxu0 0
  %1026 = vmatpush.bf16.msra.mxu0 0
  %1027 = vmatpush.bf16.msra.mxu0 0
  %1028 = vmatpush.bf16.msra.mxu0 0
  %1029 = vmatpush.bf16.msra.mxu0 0
  %1030 = vmatpush.bf16.msra.mxu0 %v1021
  %1031 = vmatmul.bf16.gmra.mxu0 %v1018
  %v1032 = vpop.f32.mrf.mxu0
  %v1033 = vadd.f32 0.0, %v1032
  %v1034 = vpop.f32.mrf.mxu0
  %1035 = vdwg.mxu0
  %1037 = vrot.lane.b32.xlu0 %v991, 16
  %v1038 = vpop.permute.xlu0 %1037
  %v1040 = vsel %vm247, %v970, %v1038
  %1042 = vrot.lane.b32.xlu0 %v1033, 16
  %v1043 = vpop.permute.xlu0 %1042
  %v1045 = vsel %vm247, %v1012, %v1043
  %s1046 = scalar_lea.vmem %s5, 16
  %v1047 = vld [vmem:[%s1046] sm:$0xf]
  %v1048 = vld [vmem:[%s1046 + $0x4] sm:$0xf]
  %v1049 = vld [vmem:[%s1046 + $0x8] sm:$0xf]
  %v1050 = vld [vmem:[%s1046 + $0xc] sm:$0xf]
  %v1051 = vpack.c.bf16 %v1045, %v1040
  %v1052 = vperm.slane %v745, 0
  %v1057 = vunpack.c.l.b16 %v1047
  %v1058 = vunpack.c.l.b16 %v1048
  %v1059 = vunpack.c.l.b16 %v1049
  %v1060 = vunpack.c.l.b16 %v1050
  %v1061 = vpack.c.b16 %v1058, %v1057
  %v1062 = vpack.c.b16 %v1060, %v1059
  %v1066 = vsel %vm125, %v1051, 0
  %1068 = vmatpush.bf16.msra.mxu0 0
  %1069 = vmatpush.bf16.msra.mxu0 0
  %1070 = vmatpush.bf16.msra.mxu0 0
  %1071 = vmatpush.bf16.msra.mxu0 0
  %1072 = vmatpush.bf16.msra.mxu0 0
  %1073 = vmatpush.bf16.msra.mxu0 0
  %1074 = vmatpush.bf16.msra.mxu0 %v1062
  %1075 = vmatpush.bf16.msra.mxu0 %v1061
  %1076 = vmatmul.bf16.gmra.mxu0 %v1066
  %v1077 = vpop.f32.mrf.mxu0
  %v1078 = vadd.f32 %v1052, %v1077
  %v1079 = vpop.f32.mrf.mxu0
  %v1080 = vadd.f32 %v1052, %v1079
  %1081 = vdwg.mxu0
  %v1082 = vadd.f32 %v1078, %v742
  %v1083 = vadd.f32 %v1080, %v743
  %v1084 = vsel %vm125, %v1082, 0.0
  %1085 = vadd.xlane.f32.xlu0 %v1084
  %v1086 = vpop.xlane.xlu0 %1085
  %v1087 = vsel %vm125, %v1083, 0.0
  %1088 = vadd.xlane.f32.xlu0 %v1087
  %v1089 = vpop.xlane.xlu0 %1088
  %v1090 = vmul.f32 %v1086, %v138
  %v1091 = vmul.f32 %v1089, %v138
  %v1092 = vmul.f32 %v1082, %v1082
  %v1093 = vmul.f32 %v1083, %v1083
  %v1094 = vsel %vm125, %v1092, 0.0
  %1095 = vadd.xlane.f32.xlu0 %v1094
  %v1096 = vpop.xlane.xlu0 %1095
  %v1097 = vsel %vm125, %v1093, 0.0
  %1098 = vadd.xlane.f32.xlu0 %v1097
  %v1099 = vpop.xlane.xlu0 %1098
  %v1100 = vmul.f32 %v1096, %v138
  %v1101 = vmul.f32 %v1099, %v138
  %v1102 = vmul.f32 %v1090, %v1090
  %v1103 = vmul.f32 %v1091, %v1091
  %v1104 = vsub.f32 %v1100, %v1102
  %v1105 = vsub.f32 %v1101, %v1103
  %v1106 = vsub.f32 %v1082, %v1090
  %v1107 = vsub.f32 %v1083, %v1091
  %v1108 = vadd.f32 %v1104, 1e-12
  %v1109 = vadd.f32 %v1105, 1e-12
  %v1110 = vrsqrt.pop %v1108
  %v1111 = vmul.f32 %v1110, %v1108
  %v1112 = vmul.f32 %v1111, %v1110
  %v1113 = vmul.f32 0.5, %v1112
  %v1114 = vsub.f32 1.5, %v1113
  %v1115 = vmul.f32 %v1110, %v1114
  %vm1116 = vweird.f32 %v1108
  %vm1117 = vweird.f32 %v1110
  %vm1118 = vmor %vm1116, %vm1117
  %v1119 = vsel %vm1118, %v1110, %v1115
  %v1120 = vrsqrt.pop %v1109
  %v1121 = vmul.f32 %v1120, %v1109
  %v1122 = vmul.f32 %v1121, %v1120
  %v1123 = vmul.f32 0.5, %v1122
  %v1124 = vsub.f32 1.5, %v1123
  %v1125 = vmul.f32 %v1120, %v1124
  %vm1126 = vweird.f32 %v1109
  %vm1127 = vweird.f32 %v1120
  %vm1128 = vmor %vm1126, %vm1127
  %v1129 = vsel %vm1128, %v1120, %v1125
  %v1130 = vmul.f32 %v1106, %v1119
  %v1131 = vmul.f32 %v1107, %v1129
  %v1132 = vperm.slane %v746, 0
  %v1133 = vmul.f32 %v1130, %v1132
  %v1134 = vmul.f32 %v1131, %v1132
  %v1135 = vperm.slane %v747, 0
  %v1136 = vadd.f32 %v1133, %v1135
  %v1137 = vadd.f32 %v1134, %v1135
  %s1138 = scalar_lea.vmem %s6, 16
  %v1139 = vld [vmem:[%s1138] sm:$0xf]
  %v1140 = vld [vmem:[%s1138 + $0x4] sm:$0xf]
  %v1141 = vld [vmem:[%s1138 + $0x8] sm:$0xf]
  %v1142 = vld [vmem:[%s1138 + $0xc] sm:$0xf]
  %v1143 = vpack.c.bf16 %v1137, %v1136
  %v1144 = vperm.slane %v748, 0
  %v1149 = vunpack.c.l.b16 %v1139
  %v1150 = vunpack.c.l.b16 %v1140
  %v1151 = vunpack.c.l.b16 %v1141
  %v1152 = vunpack.c.l.b16 %v1142
  %v1153 = vpack.c.b16 %v1150, %v1149
  %v1154 = vpack.c.b16 %v1152, %v1151
  %v1158 = vsel %vm125, %v1143, 0
  %1160 = vmatpush.bf16.msra.mxu0 0
  %1161 = vmatpush.bf16.msra.mxu0 0
  %1162 = vmatpush.bf16.msra.mxu0 0
  %1163 = vmatpush.bf16.msra.mxu0 0
  %1164 = vmatpush.bf16.msra.mxu0 0
  %1165 = vmatpush.bf16.msra.mxu0 0
  %1166 = vmatpush.bf16.msra.mxu0 %v1154
  %1167 = vmatpush.bf16.msra.mxu0 %v1153
  %1168 = vmatmul.bf16.gmra.mxu0 %v1158
  %v1169 = vpop.f32.mrf.mxu0
  %v1170 = vadd.f32 %v1144, %v1169
  %v1171 = vpop.f32.mrf.mxu0
  %v1172 = vadd.f32 %v1144, %v1171
  %1173 = vdwg.mxu0
  %v1174 = vmul.f32 %v1170, 0.5
  %v1175 = vmul.f32 %v1172, 0.5
  %v1176 = vmul.f32 %v1170, 0.044715
  %v1177 = vmul.f32 %v1172, 0.044715
  %v1178 = vmul.f32 %v1176, %v1170
  %v1179 = vmul.f32 %v1177, %v1172
  %v1180 = vmul.f32 %v1178, %v1170
  %v1181 = vmul.f32 %v1179, %v1172
  %v1182 = vadd.f32 %v1170, %v1180
  %v1183 = vadd.f32 %v1172, %v1181
  %v1184 = vmul.f32 %v1182, 0.7978846
  %v1185 = vmul.f32 %v1183, 0.7978846
  %v1186 = vtanh.pop %v1184
  %v1187 = vtanh.pop %v1185
  %v1188 = vadd.f32 %v1186, 1.0
  %v1189 = vadd.f32 %v1187, 1.0
  %v1190 = vmul.f32 %v1174, %v1188
  %v1191 = vmul.f32 %v1175, %v1189
  %s1192 = scalar_lea.vmem %s7, 32
  %v1193 = vld [vmem:[%s1192] sm:$0xf]
  %v1194 = vld [vmem:[%s1192 + $0x4] sm:$0xf]
  %v1195 = vld [vmem:[%s1192 + $0x8] sm:$0xf]
  %v1196 = vld [vmem:[%s1192 + $0xc] sm:$0xf]
  %v1197 = vld [vmem:[%s1192 + $0x10] sm:$0xf]
  %v1198 = vld [vmem:[%s1192 + $0x14] sm:$0xf]
  %v1199 = vld [vmem:[%s1192 + $0x18] sm:$0xf]
  %v1200 = vld [vmem:[%s1192 + $0x1c] sm:$0xf]
  %v1201 = vpack.c.bf16 %v1191, %v1190
  %v1202 = vperm.slane %v749, 0
  %v1211 = vunpack.c.l.b16 %v1193
  %v1212 = vunpack.c.l.b16 %v1194
  %v1213 = vunpack.c.l.b16 %v1195
  %v1214 = vunpack.c.l.b16 %v1196
  %v1215 = vunpack.c.l.b16 %v1197
  %v1216 = vunpack.c.l.b16 %v1198
  %v1217 = vunpack.c.l.b16 %v1199
  %v1218 = vunpack.c.l.b16 %v1200
  %v1219 = vpack.c.b16 %v1212, %v1211
  %v1220 = vpack.c.b16 %v1214, %v1213
  %v1221 = vpack.c.b16 %v1216, %v1215
  %v1222 = vpack.c.b16 %v1218, %v1217
  %v1228 = vsel %vm670, %v1201, 0
  %1230 = vmatpush.bf16.msra.mxu0 0
  %1231 = vmatpush.bf16.msra.mxu0 0
  %1232 = vmatpush.bf16.msra.mxu0 0
  %1233 = vmatpush.bf16.msra.mxu0 0
  %1234 = vmatpush.bf16.msra.mxu0 %v1222
  %1235 = vmatpush.bf16.msra.mxu0 %v1221
  %1236 = vmatpush.bf16.msra.mxu0 %v1220
  %1237 = vmatpush.bf16.msra.mxu0 %v1219
  %1238 = vmatmul.bf16.gmra.mxu0 %v1228
  %v1239 = vpop.f32.mrf.mxu0
  %v1240 = vadd.f32 %v1202, %v1239
  %v1241 = vpop.f32.mrf.mxu0
  %v1242 = vadd.f32 %v1202, %v1241
  %1243 = vdwg.mxu0
  %v1244 = vadd.f32 %v1240, %v1136
  %v1245 = vadd.f32 %v1242, %v1137
  %v1246 = vsel %vm125, %v1244, 0.0
  %1247 = vadd.xlane.f32.xlu0 %v1246
  %v1248 = vpop.xlane.xlu0 %1247
  %v1249 = vsel %vm125, %v1245, 0.0
  %1250 = vadd.xlane.f32.xlu0 %v1249
  %v1251 = vpop.xlane.xlu0 %1250
  %v1252 = vmul.f32 %v1248, %v138
  %v1253 = vmul.f32 %v1251, %v138
  %v1254 = vmul.f32 %v1244, %v1244
  %v1255 = vmul.f32 %v1245, %v1245
  %v1256 = vsel %vm125, %v1254, 0.0
  %1257 = vadd.xlane.f32.xlu0 %v1256
  %v1258 = vpop.xlane.xlu0 %1257
  %v1259 = vsel %vm125, %v1255, 0.0
  %1260 = vadd.xlane.f32.xlu0 %v1259
  %v1261 = vpop.xlane.xlu0 %1260
  %v1262 = vmul.f32 %v1258, %v138
  %v1263 = vmul.f32 %v1261, %v138
  %v1264 = vmul.f32 %v1252, %v1252
  %v1265 = vmul.f32 %v1253, %v1253
  %v1266 = vsub.f32 %v1262, %v1264
  %v1267 = vsub.f32 %v1263, %v1265
  %v1268 = vsub.f32 %v1244, %v1252
  %v1269 = vsub.f32 %v1245, %v1253
  %v1270 = vadd.f32 %v1266, 1e-12
  %v1271 = vadd.f32 %v1267, 1e-12
  %v1272 = vrsqrt.pop %v1270
  %v1273 = vmul.f32 %v1272, %v1270
  %v1274 = vmul.f32 %v1273, %v1272
  %v1275 = vmul.f32 0.5, %v1274
  %v1276 = vsub.f32 1.5, %v1275
  %v1277 = vmul.f32 %v1272, %v1276
  %vm1278 = vweird.f32 %v1270
  %vm1279 = vweird.f32 %v1272
  %vm1280 = vmor %vm1278, %vm1279
  %v1281 = vsel %vm1280, %v1272, %v1277
  %v1282 = vrsqrt.pop %v1271
  %v1283 = vmul.f32 %v1282, %v1271
  %v1284 = vmul.f32 %v1283, %v1282
  %v1285 = vmul.f32 0.5, %v1284
  %v1286 = vsub.f32 1.5, %v1285
  %v1287 = vmul.f32 %v1282, %v1286
  %vm1288 = vweird.f32 %v1271
  %vm1289 = vweird.f32 %v1282
  %vm1290 = vmor %vm1288, %vm1289
  %v1291 = vsel %vm1290, %v1282, %v1287
  %v1292 = vmul.f32 %v1268, %v1281
  %v1293 = vmul.f32 %v1269, %v1291
  %v1294 = vperm.slane %v750, 0
  %v1295 = vmul.f32 %v1292, %v1294
  %v1296 = vmul.f32 %v1293, %v1294
  %v1297 = vperm.slane %v751, 0
  %v1298 = vadd.f32 %v1295, %v1297
  %v1299 = vadd.f32 %v1296, %v1297
  %v1300 = vld [vmem:[%s3 + $0x2] sm:$0x1]
  %v1301 = vld [vmem:[%s8] sm:$0xf]
  %v1302 = vld [vmem:[%s8 + $0x4] sm:$0xf]
  %v1303 = vld [vmem:[%s8 + $0x8] sm:$0xf]
  %v1304 = vld [vmem:[%s8 + $0xc] sm:$0xf]
  %v1305 = vpack.c.bf16 %v1299, %v1298
  %v1306 = vperm.slane %v1300, 0
  %v1311 = vunpack.c.l.b16 %v1301
  %v1312 = vunpack.c.l.b16 %v1302
  %v1313 = vunpack.c.l.b16 %v1303
  %v1314 = vunpack.c.l.b16 %v1304
  %v1315 = vpack.c.b16 %v1312, %v1311
  %v1316 = vpack.c.b16 %v1314, %v1313
  %v1320 = vsel %vm125, %v1305, 0
  %1322 = vmatpush.bf16.msra.mxu0 0
  %1323 = vmatpush.bf16.msra.mxu0 0
  %1324 = vmatpush.bf16.msra.mxu0 0
  %1325 = vmatpush.bf16.msra.mxu0 0
  %1326 = vmatpush.bf16.msra.mxu0 0
  %1327 = vmatpush.bf16.msra.mxu0 0
  %1328 = vmatpush.bf16.msra.mxu0 %v1316
  %1329 = vmatpush.bf16.msra.mxu0 %v1315
  %1330 = vmatmul.bf16.gmra.mxu0 %v1320
  %v1331 = vpop.f32.mrf.mxu0
  %v1332 = vadd.f32 %v1306, %v1331
  %v1333 = vpop.f32.mrf.mxu0
  %v1334 = vadd.f32 %v1306, %v1333
  %1335 = vdwg.mxu0
  %1336 = vst [vmem:[%s9] sm:$0xff] %v1332
  %1337 = vst [vmem:[%s9 + $0x8] sm:$0xff] %v1334
  // Predicated region
  $region38: #{bert_seq_tok_forward.1} parent=0 // pred_check
    _
  $region39: #{bert_seq_tok_forward.1} parent=0 // pred_check_branch
    %1339 = sbr.rel (0) target = $region41
  $region40: #{bert_seq_tok_forward.1} parent=0 // pred_region
    _
  $region41: #{bert_seq_tok_forward.1} parent=0 // pred_fallthru
    _
  // Predicated region
  $region42: #{bert_seq_tok_forward.1} parent=0 // pred_check
    _
  $region43: #{bert_seq_tok_forward.1} parent=0 // pred_check_branch
    %1341 = sbr.rel (0) target = $region45
  $region44: #{bert_seq_tok_forward.1} parent=0 // pred_region
    _
  $region45: #{bert_seq_tok_forward.1} parent=0 // pred_fallthru
    _

</llo_original>
